<compile_context>
chip_gen: v5e
topology: v5e:2x2
jax: 0.10.0
libtpu: 0.0.40
codegen_flags: <defaults>
</compile_context>

<pallas_src>
import functools

import jax
import jax.numpy as jnp
from jax.experimental import pallas as pl
from jax.experimental.pallas import tpu as pltpu


def img_decoder_layer_kernel(xres_ref, xsrc_ref, bias_ref,
                             wq_ref, bq_ref, wk_ref, bk_ref, wv_ref, bv_ref,
                             wo_ref, bo_ref,
                             a2_ref, b2_ref,
                             w1_ref, b1_ref, w2_ref, bff2_ref,
                             out_ref,
                             kc_ref, vc_ref, ctx_ref,
                             *, num_heads, d_k, eps, compute_dtype, approx):
    cd = compute_dtype
    f32 = jnp.float32

    x_q = xres_ref[0]                               # (tq, D) query tile (input dtype)
    tq, D = x_q.shape

    # --- K/V projections: computed ONCE per (batch, parallel slice) and cached
    #     head-major in VMEM scratch; reused for every sequence tile. ---------
    @pl.when(pl.program_id(2) == 0)
    def _():
        x_kv = xsrc_ref[0]                          # (S, D), already compute dtype
        k = jnp.dot(x_kv, wk_ref[...], preferred_element_type=f32) + bk_ref[...]
        v = jnp.dot(x_kv, wv_ref[...], preferred_element_type=f32) + bv_ref[...]
        k_c = k.astype(cd)
        v_c = v.astype(cd)
        for h in range(num_heads):                  # pay the head relayout once
            lo = h * d_k
            kc_ref[h] = k_c[:, lo:lo + d_k]
            vc_ref[h] = v_c[:, lo:lo + d_k]

    # --- Q projection for this tile (1/sqrt(d_k) folded in once) -------------
    scale = 1.0 / jnp.sqrt(jnp.float32(d_k))
    q = jnp.dot(x_q.astype(cd), wq_ref[...], preferred_element_type=f32) + bq_ref[...]
    q_c = (q * scale).astype(cd)

    bias = bias_ref[0]                              # (1, S) additive mask bias (f32)

    # --- per-head attention; context assembled into a (tq, D) scratch --------
    # Note: additive bias + max-subtraction keeps the softmax denominator >= 1
    # even for fully masked rows, so no NaN guard is needed.
    for h in range(num_heads):                      # static unroll, heads are few
        lo = h * d_k
        qh = q_c[:, lo:lo + d_k]                    # (tq, d_k)
        # QK^T without materializing K^T: contract the last dim of both.
        scores = jax.lax.dot_general(qh, kc_ref[h], (((1,), (1,)), ((), ())),
                                     preferred_element_type=f32)   # (tq, S)
        scores = scores + bias
        m = jnp.max(scores, axis=-1, keepdims=True)
        p = jnp.exp(scores - m)
        inv = pl.reciprocal(jnp.sum(p, axis=-1, keepdims=True), approx=approx)
        p_c = (p * inv).astype(cd)
        ctx_ref[:, lo:lo + d_k] = jnp.dot(p_c, vc_ref[h],
                                          preferred_element_type=f32).astype(cd)

    # --- output projection: single full-contraction matmul -------------------
    attn_out = jnp.dot(ctx_ref[...], wo_ref[...],
                       preferred_element_type=f32) + bo_ref[...]

    # --- residual 1 (SublayerConnection's norm(x) discarded by the lambda) ---
    q1 = x_q.astype(f32) + attn_out

    # --- LayerNorm (Annotated Transformer: unbiased std, eps added to std) ---
    mean = jnp.mean(q1, axis=-1, keepdims=True)
    var = jnp.sum((q1 - mean) ** 2, axis=-1, keepdims=True) / jnp.float32(D - 1)
    inv_std = pl.reciprocal(jnp.sqrt(var) + eps, approx=approx)
    y = a2_ref[...] * (q1 - mean) * inv_std + b2_ref[...]

    # --- position-wise feed-forward: w2(relu(w1(y))) --------------------------
    h1 = jnp.maximum(
        jnp.dot(y.astype(cd), w1_ref[...], preferred_element_type=f32) + b1_ref[...],
        0.0)
    ff = jnp.dot(h1.astype(cd), w2_ref[...], preferred_element_type=f32) + bff2_ref[...]

    # --- residual 2 -----------------------------------------------------------
    out_ref[0] = (q1 + ff).astype(out_ref.dtype)


def _vmem_budget_bytes():
    """Generation-aware VMEM budget (capability probe only)."""
    cap = 128 << 20
    try:
        cap = int(pltpu.get_tpu_info().vmem_capacity_bytes)
    except Exception:
        pass  # probe failed: assume the common 128 MiB generations (v5e/v6e)
    if cap <= (72 << 20):                 # v7x-class: 64 MiB per TensorCore
        return min(cap - (8 << 20), 56 << 20)
    return min(int(0.8 * cap), 100 << 20)


def _vmem_needed(tq, *, S, D, d_ff, cd_size, in_size, out_size):
    """Rough VMEM estimate for one grid step at sequence tile tq."""
    inputs = 2 * (tq * D * in_size        # per-tile residual/Q source (dbl-buffered)
                  + S * D * cd_size       # K/V source block
                  + S * 4)                # additive mask bias
    weights = 2 * ((4 * D * D + 2 * D * d_ff) * cd_size + (6 * D + d_ff) * 4)
    outputs = 2 * tq * D * out_size
    scratch = (2 * S * D + tq * D) * cd_size           # K/V caches + context
    transient = (2 * S * D                              # K/V projections (tt==0)
                 + 6 * tq * D                           # q, q1, y, attn, misc
                 + 2 * tq * S                           # scores / probs
                 + 2 * tq * d_ff) * 4                   # FFN hidden
    return int(1.2 * (inputs + weights + outputs + scratch + transient)) + (2 << 20)


def _pick_seq_tile(S, est_fn, budget, max_tile=1024):
    """Largest sequence tile that divides S, is sublane-aligned, and fits VMEM."""
    cands = []
    if S <= max_tile:
        cands.append(S)                   # untiled: no (8,128) constraint issues
    for t in range(8, min(S, max_tile) + 1, 8):
        if S % t == 0:
            cands.append(t)
    cands = sorted(set(cands), reverse=True)
    if not cands:
        return S
    for t in cands:
        if est_fn(t) <= budget:
            return t
    return cands[-1]


def img_decoder_layer(query, src_mask, tgt_mask, params, *, num_heads,
                      compute_dtype=jnp.bfloat16, seq_tile=None):
    # tgt_mask is unused, mirroring the PyTorch forward.
    del tgt_mask
    B, S, D = query.shape
    d_ff = params["w1"].shape[1]
    assert D % num_heads == 0, "model dim must divide evenly into heads"
    d_k = D // num_heads
    assert d_k % 8 == 0, "head dim should be sublane-aligned (multiple of 8)"

    cd = compute_dtype
    f32 = jnp.float32
    cd_size = jnp.dtype(cd).itemsize
    in_size = jnp.dtype(query.dtype).itemsize

    budget = _vmem_budget_bytes()
    est = functools.partial(_vmem_needed, S=S, D=D, d_ff=d_ff,
                            cd_size=cd_size, in_size=in_size, out_size=in_size)
    tq = seq_tile if seq_tile is not None else _pick_seq_tile(S, est, budget)
    assert S % tq == 0, "sequence tile must divide S"
    n_tiles = S // tq
    # v7x megacore: if there is a single batch, split the tile axis so both
    # TensorCores get work (each rebuilds its own K/V cache once — cheap).
    n_par = 2 if (B == 1 and n_tiles >= 2 and n_tiles % 2 == 0) else 1
    n_inner = n_tiles // n_par

    # Matmul operands (weights) in compute dtype; biases / LayerNorm params f32.
    w = {n: params[n].astype(cd) for n in ("wq", "wk", "wv", "wo", "w1", "w2")}
    b = {n: params[n].astype(f32)
         for n in ("bq", "bk", "bv", "bo", "a2", "b2", "b1", "bff2")}

    # K/V source shipped already in compute dtype (halves HBM/VMEM for the
    # largest block in the bf16 path); residual read stays at input precision.
    x_src = query.astype(cd)
    # Additive mask bias precomputed once (no per-tile compare+select).
    mask_bias = jnp.where(src_mask == 0, jnp.float32(-1e9), jnp.float32(0.0))

    kernel = functools.partial(
        img_decoder_layer_kernel, num_heads=num_heads, d_k=d_k, eps=1e-6,
        compute_dtype=cd, approx=(jnp.dtype(cd) != jnp.dtype(f32)))

    def tile_idx(bb, gg, tt):
        return (bb, gg * n_inner + tt, 0)

    per_batch = lambda bb, gg, tt: (bb, 0, 0)
    const2 = lambda bb, gg, tt: (0, 0)

    in_specs = [
        pl.BlockSpec((1, tq, D), tile_idx),              # residual / Q source tile
        pl.BlockSpec((1, S, D), per_batch),              # K/V source (per batch)
        pl.BlockSpec((1, 1, S), per_batch),              # additive mask bias
        pl.BlockSpec((D, D), const2), pl.BlockSpec((1, D), const2),       # Wq, bq
        pl.BlockSpec((D, D), const2), pl.BlockSpec((1, D), const2),       # Wk, bk
        pl.BlockSpec((D, D), const2), pl.BlockSpec((1, D), const2),       # Wv, bv
        pl.BlockSpec((D, D), const2), pl.BlockSpec((1, D), const2),       # Wo, bo
        pl.BlockSpec((1, D), const2), pl.BlockSpec((1, D), const2),       # a_2, b_2
        pl.BlockSpec((D, d_ff), const2), pl.BlockSpec((1, d_ff), const2), # w1, b1
        pl.BlockSpec((d_ff, D), const2), pl.BlockSpec((1, D), const2),    # w2, b2
    ]

    vmem_limit = int(min(budget, max(32 << 20, est(tq))))

    fn = pl.pallas_call(
        kernel,
        out_shape=jax.ShapeDtypeStruct((B, S, D), query.dtype),
        grid=(B, n_par, n_inner),
        in_specs=in_specs,
        out_specs=pl.BlockSpec((1, tq, D), tile_idx),
        scratch_shapes=[
            pltpu.VMEM((num_heads, S, d_k), cd),   # K cache (head-major)
            pltpu.VMEM((num_heads, S, d_k), cd),   # V cache (head-major)
            pltpu.VMEM((tq, D), cd),               # attention context buffer
        ],
        compiler_params=pltpu.CompilerParams(
            dimension_semantics=("parallel", "parallel", "arbitrary"),
            vmem_limit_bytes=vmem_limit),
    )
    return fn(query, x_src, mask_bias,
              w["wq"], b["bq"], w["wk"], b["bk"], w["wv"], b["bv"],
              w["wo"], b["bo"], b["a2"], b["b2"],
              w["w1"], b["b1"], w["w2"], b["bff2"])


def reference(query, src_mask, params, *, num_heads, matmul_dtype=jnp.float32):
    """Pure-JAX reference.  matmul_dtype mirrors the kernel's compute dtype."""
    B, S, D = query.shape
    d_k = D // num_heads
    cd = matmul_dtype
    f32 = jnp.float32

    def mm(a, w):
        return jnp.dot(a.astype(cd), w.astype(cd), preferred_element_type=f32)

    x = query
    q = mm(x, params["wq"]) + params["bq"]
    k = mm(x, params["wk"]) + params["bk"]
    v = mm(x, params["wv"]) + params["bv"]
    q = q * (1.0 / jnp.sqrt(jnp.float32(d_k)))

    def split(t):
        return t.astype(cd).reshape(B, S, num_heads, d_k).transpose(0, 2, 1, 3)

    qh, kh, vh = split(q), split(k), split(v)
    scores = jnp.einsum("bhqd,bhkd->bhqk", qh, kh, preferred_element_type=f32)
    mask = src_mask[:, None, :, :]                  # (B, 1, 1, S)
    scores = jnp.where(mask == 0, -1e9, scores)
    p = jax.nn.softmax(scores, axis=-1)
    ctx = jnp.einsum("bhqk,bhkd->bhqd", p.astype(cd), vh,
                     preferred_element_type=f32)
    ctx = ctx.transpose(0, 2, 1, 3).reshape(B, S, D)
    attn_out = mm(ctx, params["wo"]) + params["bo"]
    q1 = x + attn_out
    mean = q1.mean(-1, keepdims=True)
    std = jnp.sqrt(((q1 - mean) ** 2).sum(-1, keepdims=True) / (D - 1))
    y = params["a2"] * (q1 - mean) / (std + 1e-6) + params["b2"]
    h1 = jnp.maximum(mm(y, params["w1"]) + params["b1"], 0.0)
    ff = mm(h1, params["w2"]) + params["bff2"]
    return q1 + ff


def init_params(key, D, d_ff):
    ks = jax.random.split(key, 8)
    scale = 0.1

    def lin(k, m, n):
        return scale * jax.random.normal(k, (m, n), jnp.float32)

    return {
        "wq": lin(ks[0], D, D), "bq": jnp.zeros((1, D), jnp.float32),
        "wk": lin(ks[1], D, D), "bk": jnp.zeros((1, D), jnp.float32),
        "wv": lin(ks[2], D, D), "bv": jnp.zeros((1, D), jnp.float32),
        "wo": lin(ks[3], D, D), "bo": jnp.zeros((1, D), jnp.float32),
        "a2": jnp.ones((1, D), jnp.float32), "b2": jnp.zeros((1, D), jnp.float32),
        "w1": lin(ks[4], D, d_ff), "b1": scale * jax.random.normal(ks[5], (1, d_ff), jnp.float32),
        "w2": lin(ks[6], d_ff, D), "bff2": scale * jax.random.normal(ks[7], (1, D), jnp.float32),
    }


if __name__ == "__main__":
    B, S, D, H, D_FF = 2, 8, 32, 4, 64

    key = jax.random.PRNGKey(0)
    k_q, k_p = jax.random.split(key)
    query = jax.random.normal(k_q, (B, S, D), jnp.float32)

    # src_mask: (B, 1, S); mask out last two key positions for batch 1.
    src_mask = jnp.ones((B, 1, S), jnp.float32).at[1, 0, -2:].set(0.0)
    tgt_mask = jnp.ones((B, 1, S), jnp.float32)   # unused, mirrors PyTorch signature

    params = init_params(k_p, D, D_FF)

    ref_f32 = reference(query, src_mask, params, num_heads=H,
                        matmul_dtype=jnp.float32)
    ref_bf16 = reference(query, src_mask, params, num_heads=H,
                         matmul_dtype=jnp.bfloat16)

    # Performance configuration: bf16 matmul operands, f32 accumulation/stats,
    # approx (EUP) reciprocals for softmax / LayerNorm.
    out_bf16 = img_decoder_layer(query, src_mask, tgt_mask, params, num_heads=H)
    out_bf16 = jax.block_until_ready(out_bf16)
    assert out_bf16.shape == (B, S, D)
    assert jnp.allclose(out_bf16, ref_bf16, atol=5e-3, rtol=5e-3), \
        float(jnp.abs(out_bf16 - ref_bf16).max())
    assert jnp.allclose(out_bf16, ref_f32, atol=5e-2, rtol=5e-2), \
        float(jnp.abs(out_bf16 - ref_f32).max())

    # Exact f32 path (exact reciprocals): validates the module semantics tightly.
    out_f32 = img_decoder_layer(query, src_mask, tgt_mask, params, num_heads=H,
                                compute_dtype=jnp.float32)
    out_f32 = jax.block_until_ready(out_f32)
    assert jnp.allclose(out_f32, ref_f32, atol=2e-4, rtol=2e-4), \
        float(jnp.abs(out_f32 - ref_f32).max())

    print("KERNEL_OK")
</pallas_src>

<mosaic_0001>
module attributes {stable_mosaic.version = 11 : i64} {
  func.func @img_decoder_layer_kernel(%arg0: i32, %arg1: i32, %arg2: i32, %arg3: memref<1x8x32xf32, #tpu.memory_space<vmem>>, %arg4: memref<1x8x32xbf16, #tpu.memory_space<vmem>>, %arg5: memref<1x1x8xf32, #tpu.memory_space<vmem>>, %arg6: memref<32x32xbf16, #tpu.memory_space<vmem>>, %arg7: memref<1x32xf32, #tpu.memory_space<vmem>>, %arg8: memref<32x32xbf16, #tpu.memory_space<vmem>>, %arg9: memref<1x32xf32, #tpu.memory_space<vmem>>, %arg10: memref<32x32xbf16, #tpu.memory_space<vmem>>, %arg11: memref<1x32xf32, #tpu.memory_space<vmem>>, %arg12: memref<32x32xbf16, #tpu.memory_space<vmem>>, %arg13: memref<1x32xf32, #tpu.memory_space<vmem>>, %arg14: memref<1x32xf32, #tpu.memory_space<vmem>>, %arg15: memref<1x32xf32, #tpu.memory_space<vmem>>, %arg16: memref<32x64xbf16, #tpu.memory_space<vmem>>, %arg17: memref<1x64xf32, #tpu.memory_space<vmem>>, %arg18: memref<64x32xbf16, #tpu.memory_space<vmem>>, %arg19: memref<1x32xf32, #tpu.memory_space<vmem>>, %arg20: memref<1x8x32xf32, #tpu.memory_space<vmem>>, %arg21: memref<4x8x8xbf16, #tpu.memory_space<vmem>>, %arg22: memref<4x8x8xbf16, #tpu.memory_space<vmem>>, %arg23: memref<8x32xbf16, #tpu.memory_space<vmem>>) attributes {dimension_semantics = [#tpu.dimension_semantics<parallel>, #tpu.dimension_semantics<parallel>, #tpu.dimension_semantics<arbitrary>], iteration_bounds = array<i64: 2, 1, 1>, scalar_prefetch = 0 : i64, scratch_operands = 3 : i64, tpu.core_type = #tpu.core_type<tc>, window_params = [{transform_indices = @transform_0, window_bounds = array<i64: 1, 8, 32>}, {transform_indices = @transform_1, window_bounds = array<i64: 1, 8, 32>}, {transform_indices = @transform_2, window_bounds = array<i64: 1, 1, 8>}, {pipeline_mode = #tpu.pipeline_mode<synchronous>, transform_indices = @transform_3, window_bounds = array<i64: 32, 32>}, {pipeline_mode = #tpu.pipeline_mode<synchronous>, transform_indices = @transform_4, window_bounds = array<i64: 1, 32>}, {pipeline_mode = #tpu.pipeline_mode<synchronous>, transform_indices = @transform_5, window_bounds = array<i64: 32, 32>}, {pipeline_mode = #tpu.pipeline_mode<synchronous>, transform_indices = @transform_6, window_bounds = array<i64: 1, 32>}, {pipeline_mode = #tpu.pipeline_mode<synchronous>, transform_indices = @transform_7, window_bounds = array<i64: 32, 32>}, {pipeline_mode = #tpu.pipeline_mode<synchronous>, transform_indices = @transform_8, window_bounds = array<i64: 1, 32>}, {pipeline_mode = #tpu.pipeline_mode<synchronous>, transform_indices = @transform_9, window_bounds = array<i64: 32, 32>}, {pipeline_mode = #tpu.pipeline_mode<synchronous>, transform_indices = @transform_10, window_bounds = array<i64: 1, 32>}, {pipeline_mode = #tpu.pipeline_mode<synchronous>, transform_indices = @transform_11, window_bounds = array<i64: 1, 32>}, {pipeline_mode = #tpu.pipeline_mode<synchronous>, transform_indices = @transform_12, window_bounds = array<i64: 1, 32>}, {pipeline_mode = #tpu.pipeline_mode<synchronous>, transform_indices = @transform_13, window_bounds = array<i64: 32, 64>}, {pipeline_mode = #tpu.pipeline_mode<synchronous>, transform_indices = @transform_14, window_bounds = array<i64: 1, 64>}, {pipeline_mode = #tpu.pipeline_mode<synchronous>, transform_indices = @transform_15, window_bounds = array<i64: 64, 32>}, {pipeline_mode = #tpu.pipeline_mode<synchronous>, transform_indices = @transform_16, window_bounds = array<i64: 1, 32>}, {transform_indices = @transform_17, window_bounds = array<i64: 1, 8, 32>}]} {
    %c0 = arith.constant 0 : index
    %c0_0 = arith.constant 0 : index
    %c0_1 = arith.constant 0 : index
    %0 = vector.load %arg3[%c0, %c0_0, %c0_1] : memref<1x8x32xf32, #tpu.memory_space<vmem>>, vector<1x8x32xf32>
    %1 = vector.shape_cast %0 : vector<1x8x32xf32> to vector<8x32xf32>
    %c0_i32 = arith.constant 0 : i32
    %2 = arith.cmpi eq, %arg2, %c0_i32 : i32
    %3 = arith.extui %2 : i1 to i32
    %c0_i32_2 = arith.constant 0 : i32
    %4 = arith.cmpi ne, %3, %c0_i32_2 : i32
    scf.if %4 {
      %c0_84 = arith.constant 0 : index
      %c0_85 = arith.constant 0 : index
      %c0_86 = arith.constant 0 : index
      %156 = vector.load %arg4[%c0_84, %c0_85, %c0_86] : memref<1x8x32xbf16, #tpu.memory_space<vmem>>, vector<1x8x32xbf16>
      %157 = vector.shape_cast %156 : vector<1x8x32xbf16> to vector<8x32xbf16>
      %c0_87 = arith.constant 0 : index
      %c0_88 = arith.constant 0 : index
      %158 = vector.load %arg8[%c0_87, %c0_88] : memref<32x32xbf16, #tpu.memory_space<vmem>>, vector<32x32xbf16>
      %cst_89 = arith.constant dense<0.000000e+00> : vector<8x32xf32>
      %159 = tpu.matmul %157, %158, %cst_89 {dimension_numbers = #tpu.dot_dimension_numbers<[1], [0], [0], [1], [0, 0, 1, 1], [], []>} : vector<8x32xbf16>, vector<32x32xbf16>, vector<8x32xf32> -> vector<8x32xf32>
      %c0_90 = arith.constant 0 : index
      %c0_91 = arith.constant 0 : index
      %160 = vector.load %arg9[%c0_90, %c0_91] : memref<1x32xf32, #tpu.memory_space<vmem>>, vector<1x32xf32>
      %161 = vector.broadcast %160 : vector<1x32xf32> to vector<8x32xf32>
      %162 = arith.addf %159, %161 : vector<8x32xf32>
      %c0_92 = arith.constant 0 : index
      %c0_93 = arith.constant 0 : index
      %163 = vector.load %arg10[%c0_92, %c0_93] : memref<32x32xbf16, #tpu.memory_space<vmem>>, vector<32x32xbf16>
      %cst_94 = arith.constant dense<0.000000e+00> : vector<8x32xf32>
      %164 = tpu.matmul %157, %163, %cst_94 {dimension_numbers = #tpu.dot_dimension_numbers<[1], [0], [0], [1], [0, 0, 1, 1], [], []>} : vector<8x32xbf16>, vector<32x32xbf16>, vector<8x32xf32> -> vector<8x32xf32>
      %c0_95 = arith.constant 0 : index
      %c0_96 = arith.constant 0 : index
      %165 = vector.load %arg11[%c0_95, %c0_96] : memref<1x32xf32, #tpu.memory_space<vmem>>, vector<1x32xf32>
      %166 = vector.broadcast %165 : vector<1x32xf32> to vector<8x32xf32>
      %167 = arith.addf %164, %166 : vector<8x32xf32>
      %168 = arith.truncf %162 : vector<8x32xf32> to vector<8x32xbf16>
      %169 = arith.truncf %167 : vector<8x32xf32> to vector<8x32xbf16>
      %170 = vector.extract_strided_slice %168 {offsets = [0, 0], sizes = [8, 8], strides = [1, 1]} : vector<8x32xbf16> to vector<8x8xbf16>
      %c0_97 = arith.constant 0 : index
      %c0_98 = arith.constant 0 : index
      %c0_99 = arith.constant 0 : index
      %171 = vector.load %arg21[%c0_97, %c0_98, %c0_99] : memref<4x8x8xbf16, #tpu.memory_space<vmem>>, vector<1x8x8xbf16>
      %172 = vector.shape_cast %171 : vector<1x8x8xbf16> to vector<8x8xbf16>
      %173 = vector.shape_cast %170 : vector<8x8xbf16> to vector<1x8x8xbf16>
      tpu.vector_store %arg21[%c0_97, %c0_98, %c0_99], %173 {strides = array<i32>} : memref<4x8x8xbf16, #tpu.memory_space<vmem>>, vector<1x8x8xbf16>,
      %174 = vector.extract_strided_slice %169 {offsets = [0, 0], sizes = [8, 8], strides = [1, 1]} : vector<8x32xbf16> to vector<8x8xbf16>
      %c0_100 = arith.constant 0 : index
      %c0_101 = arith.constant 0 : index
      %c0_102 = arith.constant 0 : index
      %175 = vector.load %arg22[%c0_100, %c0_101, %c0_102] : memref<4x8x8xbf16, #tpu.memory_space<vmem>>, vector<1x8x8xbf16>
      %176 = vector.shape_cast %175 : vector<1x8x8xbf16> to vector<8x8xbf16>
      %177 = vector.shape_cast %174 : vector<8x8xbf16> to vector<1x8x8xbf16>
      tpu.vector_store %arg22[%c0_100, %c0_101, %c0_102], %177 {strides = array<i32>} : memref<4x8x8xbf16, #tpu.memory_space<vmem>>, vector<1x8x8xbf16>,
      %178 = vector.extract_strided_slice %168 {offsets = [0, 8], sizes = [8, 8], strides = [1, 1]} : vector<8x32xbf16> to vector<8x8xbf16>
      %c1_103 = arith.constant 1 : index
      %c0_104 = arith.constant 0 : index
      %c0_105 = arith.constant 0 : index
      %179 = vector.load %arg21[%c1_103, %c0_104, %c0_105] : memref<4x8x8xbf16, #tpu.memory_space<vmem>>, vector<1x8x8xbf16>
      %180 = vector.shape_cast %179 : vector<1x8x8xbf16> to vector<8x8xbf16>
      %181 = vector.shape_cast %178 : vector<8x8xbf16> to vector<1x8x8xbf16>
      tpu.vector_store %arg21[%c1_103, %c0_104, %c0_105], %181 {strides = array<i32>} : memref<4x8x8xbf16, #tpu.memory_space<vmem>>, vector<1x8x8xbf16>,
      %182 = vector.extract_strided_slice %169 {offsets = [0, 8], sizes = [8, 8], strides = [1, 1]} : vector<8x32xbf16> to vector<8x8xbf16>
      %c1_106 = arith.constant 1 : index
      %c0_107 = arith.constant 0 : index
      %c0_108 = arith.constant 0 : index
      %183 = vector.load %arg22[%c1_106, %c0_107, %c0_108] : memref<4x8x8xbf16, #tpu.memory_space<vmem>>, vector<1x8x8xbf16>
      %184 = vector.shape_cast %183 : vector<1x8x8xbf16> to vector<8x8xbf16>
      %185 = vector.shape_cast %182 : vector<8x8xbf16> to vector<1x8x8xbf16>
      tpu.vector_store %arg22[%c1_106, %c0_107, %c0_108], %185 {strides = array<i32>} : memref<4x8x8xbf16, #tpu.memory_space<vmem>>, vector<1x8x8xbf16>,
      %186 = vector.extract_strided_slice %168 {offsets = [0, 16], sizes = [8, 8], strides = [1, 1]} : vector<8x32xbf16> to vector<8x8xbf16>
      %c2_109 = arith.constant 2 : index
      %c0_110 = arith.constant 0 : index
      %c0_111 = arith.constant 0 : index
      %187 = vector.load %arg21[%c2_109, %c0_110, %c0_111] : memref<4x8x8xbf16, #tpu.memory_space<vmem>>, vector<1x8x8xbf16>
      %188 = vector.shape_cast %187 : vector<1x8x8xbf16> to vector<8x8xbf16>
      %189 = vector.shape_cast %186 : vector<8x8xbf16> to vector<1x8x8xbf16>
      tpu.vector_store %arg21[%c2_109, %c0_110, %c0_111], %189 {strides = array<i32>} : memref<4x8x8xbf16, #tpu.memory_space<vmem>>, vector<1x8x8xbf16>,
      %190 = vector.extract_strided_slice %169 {offsets = [0, 16], sizes = [8, 8], strides = [1, 1]} : vector<8x32xbf16> to vector<8x8xbf16>
      %c2_112 = arith.constant 2 : index
      %c0_113 = arith.constant 0 : index
      %c0_114 = arith.constant 0 : index
      %191 = vector.load %arg22[%c2_112, %c0_113, %c0_114] : memref<4x8x8xbf16, #tpu.memory_space<vmem>>, vector<1x8x8xbf16>
      %192 = vector.shape_cast %191 : vector<1x8x8xbf16> to vector<8x8xbf16>
      %193 = vector.shape_cast %190 : vector<8x8xbf16> to vector<1x8x8xbf16>
      tpu.vector_store %arg22[%c2_112, %c0_113, %c0_114], %193 {strides = array<i32>} : memref<4x8x8xbf16, #tpu.memory_space<vmem>>, vector<1x8x8xbf16>,
      %194 = vector.extract_strided_slice %168 {offsets = [0, 24], sizes = [8, 8], strides = [1, 1]} : vector<8x32xbf16> to vector<8x8xbf16>
      %c3_115 = arith.constant 3 : index
      %c0_116 = arith.constant 0 : index
      %c0_117 = arith.constant 0 : index
      %195 = vector.load %arg21[%c3_115, %c0_116, %c0_117] : memref<4x8x8xbf16, #tpu.memory_space<vmem>>, vector<1x8x8xbf16>
      %196 = vector.shape_cast %195 : vector<1x8x8xbf16> to vector<8x8xbf16>
      %197 = vector.shape_cast %194 : vector<8x8xbf16> to vector<1x8x8xbf16>
      tpu.vector_store %arg21[%c3_115, %c0_116, %c0_117], %197 {strides = array<i32>} : memref<4x8x8xbf16, #tpu.memory_space<vmem>>, vector<1x8x8xbf16>,
      %198 = vector.extract_strided_slice %169 {offsets = [0, 24], sizes = [8, 8], strides = [1, 1]} : vector<8x32xbf16> to vector<8x8xbf16>
      %c3_118 = arith.constant 3 : index
      %c0_119 = arith.constant 0 : index
      %c0_120 = arith.constant 0 : index
      %199 = vector.load %arg22[%c3_118, %c0_119, %c0_120] : memref<4x8x8xbf16, #tpu.memory_space<vmem>>, vector<1x8x8xbf16>
      %200 = vector.shape_cast %199 : vector<1x8x8xbf16> to vector<8x8xbf16>
      %201 = vector.shape_cast %198 : vector<8x8xbf16> to vector<1x8x8xbf16>
      tpu.vector_store %arg22[%c3_118, %c0_119, %c0_120], %201 {strides = array<i32>} : memref<4x8x8xbf16, #tpu.memory_space<vmem>>, vector<1x8x8xbf16>,
    } else {
    }
    %cst = arith.constant 8.000000e+00 : f32
    %5 = math.sqrt %cst : f32
    %cst_3 = arith.constant 1.000000e+00 : f32
    %6 = arith.divf %cst_3, %5 : f32
    %7 = arith.truncf %1 : vector<8x32xf32> to vector<8x32xbf16>
    %c0_4 = arith.constant 0 : index
    %c0_5 = arith.constant 0 : index
    %8 = vector.load %arg6[%c0_4, %c0_5] : memref<32x32xbf16, #tpu.memory_space<vmem>>, vector<32x32xbf16>
    %cst_6 = arith.constant dense<0.000000e+00> : vector<8x32xf32>
    %9 = tpu.matmul %7, %8, %cst_6 {dimension_numbers = #tpu.dot_dimension_numbers<[1], [0], [0], [1], [0, 0, 1, 1], [], []>} : vector<8x32xbf16>, vector<32x32xbf16>, vector<8x32xf32> -> vector<8x32xf32>
    %c0_7 = arith.constant 0 : index
    %c0_8 = arith.constant 0 : index
    %10 = vector.load %arg7[%c0_7, %c0_8] : memref<1x32xf32, #tpu.memory_space<vmem>>, vector<1x32xf32>
    %11 = vector.broadcast %10 : vector<1x32xf32> to vector<8x32xf32>
    %12 = arith.addf %9, %11 : vector<8x32xf32>
    %13 = vector.broadcast %6 : f32 to vector<8x32xf32>
    %14 = arith.mulf %12, %13 : vector<8x32xf32>
    %15 = arith.truncf %14 : vector<8x32xf32> to vector<8x32xbf16>
    %c0_9 = arith.constant 0 : index
    %c0_10 = arith.constant 0 : index
    %c0_11 = arith.constant 0 : index
    %16 = vector.load %arg5[%c0_9, %c0_10, %c0_11] : memref<1x1x8xf32, #tpu.memory_space<vmem>>, vector<1x1x8xf32>
    %17 = vector.shape_cast %16 : vector<1x1x8xf32> to vector<1x8xf32>
    %18 = vector.extract_strided_slice %15 {offsets = [0, 0], sizes = [8, 8], strides = [1, 1]} : vector<8x32xbf16> to vector<8x8xbf16>
    %c0_12 = arith.constant 0 : index
    %c0_13 = arith.constant 0 : index
    %c0_14 = arith.constant 0 : index
    %19 = vector.load %arg21[%c0_12, %c0_13, %c0_14] : memref<4x8x8xbf16, #tpu.memory_space<vmem>>, vector<1x8x8xbf16>
    %20 = vector.shape_cast %19 : vector<1x8x8xbf16> to vector<8x8xbf16>
    %cst_15 = arith.constant dense<0.000000e+00> : vector<8x8xf32>
    %21 = tpu.matmul %18, %20, %cst_15 {dimension_numbers = #tpu.dot_dimension_numbers<[1], [1], [0], [0], [0, 0, 1, 0], [], []>} : vector<8x8xbf16>, vector<8x8xbf16>, vector<8x8xf32> -> vector<8x8xf32>
    %22 = vector.broadcast %17 : vector<1x8xf32> to vector<8x8xf32>
    %23 = arith.addf %21, %22 : vector<8x8xf32>
    %cst_16 = arith.constant dense<0xFF800000> : vector<8xf32>
    %24 = vector.multi_reduction <maximumf>, %23, %cst_16 [1] : vector<8x8xf32> to vector<8xf32>
    %25 = vector.shape_cast %24 : vector<8xf32> to vector<8x1xf32>
    %26 = vector.broadcast %25 : vector<8x1xf32> to vector<8x8xf32>
    %27 = arith.subf %23, %26 : vector<8x8xf32>
    %28 = math.exp %27 : vector<8x8xf32>
    %cst_17 = arith.constant dense<0.000000e+00> : vector<8xf32>
    %29 = vector.multi_reduction <add>, %28, %cst_17 [1] : vector<8x8xf32> to vector<8xf32>
    %30 = vector.shape_cast %29 : vector<8xf32> to vector<8x1xf32>
    %31 = tpu.reciprocal %30 {approx = true} : vector<8x1xf32> -> vector<8x1xf32>
    %32 = vector.broadcast %31 : vector<8x1xf32> to vector<8x8xf32>
    %33 = arith.mulf %28, %32 : vector<8x8xf32>
    %34 = arith.truncf %33 : vector<8x8xf32> to vector<8x8xbf16>
    %c0_18 = arith.constant 0 : index
    %c0_19 = arith.constant 0 : index
    %c0_20 = arith.constant 0 : index
    %35 = vector.load %arg22[%c0_18, %c0_19, %c0_20] : memref<4x8x8xbf16, #tpu.memory_space<vmem>>, vector<1x8x8xbf16>
    %36 = vector.shape_cast %35 : vector<1x8x8xbf16> to vector<8x8xbf16>
    %cst_21 = arith.constant dense<0.000000e+00> : vector<8x8xf32>
    %37 = tpu.matmul %34, %36, %cst_21 {dimension_numbers = #tpu.dot_dimension_numbers<[1], [0], [0], [1], [0, 0, 1, 1], [], []>} : vector<8x8xbf16>, vector<8x8xbf16>, vector<8x8xf32> -> vector<8x8xf32>
    %38 = arith.truncf %37 : vector<8x8xf32> to vector<8x8xbf16>
    %c0_22 = arith.constant 0 : index
    %c0_23 = arith.constant 0 : index
    %39 = vector.load %arg23[%c0_22, %c0_23] : memref<8x32xbf16, #tpu.memory_space<vmem>>, vector<8x8xbf16>
    tpu.vector_store %arg23[%c0_22, %c0_23], %38 {strides = array<i32>} : memref<8x32xbf16, #tpu.memory_space<vmem>>, vector<8x8xbf16>,
    %40 = vector.extract_strided_slice %15 {offsets = [0, 8], sizes = [8, 8], strides = [1, 1]} : vector<8x32xbf16> to vector<8x8xbf16>
    %c1 = arith.constant 1 : index
    %c0_24 = arith.constant 0 : index
    %c0_25 = arith.constant 0 : index
    %41 = vector.load %arg21[%c1, %c0_24, %c0_25] : memref<4x8x8xbf16, #tpu.memory_space<vmem>>, vector<1x8x8xbf16>
    %42 = vector.shape_cast %41 : vector<1x8x8xbf16> to vector<8x8xbf16>
    %cst_26 = arith.constant dense<0.000000e+00> : vector<8x8xf32>
    %43 = tpu.matmul %40, %42, %cst_26 {dimension_numbers = #tpu.dot_dimension_numbers<[1], [1], [0], [0], [0, 0, 1, 0], [], []>} : vector<8x8xbf16>, vector<8x8xbf16>, vector<8x8xf32> -> vector<8x8xf32>
    %44 = vector.broadcast %17 : vector<1x8xf32> to vector<8x8xf32>
    %45 = arith.addf %43, %44 : vector<8x8xf32>
    %cst_27 = arith.constant dense<0xFF800000> : vector<8xf32>
    %46 = vector.multi_reduction <maximumf>, %45, %cst_27 [1] : vector<8x8xf32> to vector<8xf32>
    %47 = vector.shape_cast %46 : vector<8xf32> to vector<8x1xf32>
    %48 = vector.broadcast %47 : vector<8x1xf32> to vector<8x8xf32>
    %49 = arith.subf %45, %48 : vector<8x8xf32>
    %50 = math.exp %49 : vector<8x8xf32>
    %cst_28 = arith.constant dense<0.000000e+00> : vector<8xf32>
    %51 = vector.multi_reduction <add>, %50, %cst_28 [1] : vector<8x8xf32> to vector<8xf32>
    %52 = vector.shape_cast %51 : vector<8xf32> to vector<8x1xf32>
    %53 = tpu.reciprocal %52 {approx = true} : vector<8x1xf32> -> vector<8x1xf32>
    %54 = vector.broadcast %53 : vector<8x1xf32> to vector<8x8xf32>
    %55 = arith.mulf %50, %54 : vector<8x8xf32>
    %56 = arith.truncf %55 : vector<8x8xf32> to vector<8x8xbf16>
    %c1_29 = arith.constant 1 : index
    %c0_30 = arith.constant 0 : index
    %c0_31 = arith.constant 0 : index
    %57 = vector.load %arg22[%c1_29, %c0_30, %c0_31] : memref<4x8x8xbf16, #tpu.memory_space<vmem>>, vector<1x8x8xbf16>
    %58 = vector.shape_cast %57 : vector<1x8x8xbf16> to vector<8x8xbf16>
    %cst_32 = arith.constant dense<0.000000e+00> : vector<8x8xf32>
    %59 = tpu.matmul %56, %58, %cst_32 {dimension_numbers = #tpu.dot_dimension_numbers<[1], [0], [0], [1], [0, 0, 1, 1], [], []>} : vector<8x8xbf16>, vector<8x8xbf16>, vector<8x8xf32> -> vector<8x8xf32>
    %60 = arith.truncf %59 : vector<8x8xf32> to vector<8x8xbf16>
    %c0_33 = arith.constant 0 : index
    %c8 = arith.constant 8 : index
    %61 = vector.load %arg23[%c0_33, %c8] : memref<8x32xbf16, #tpu.memory_space<vmem>>, vector<8x8xbf16>
    tpu.vector_store %arg23[%c0_33, %c8], %60 {strides = array<i32>} : memref<8x32xbf16, #tpu.memory_space<vmem>>, vector<8x8xbf16>,
    %62 = vector.extract_strided_slice %15 {offsets = [0, 16], sizes = [8, 8], strides = [1, 1]} : vector<8x32xbf16> to vector<8x8xbf16>
    %c2 = arith.constant 2 : index
    %c0_34 = arith.constant 0 : index
    %c0_35 = arith.constant 0 : index
    %63 = vector.load %arg21[%c2, %c0_34, %c0_35] : memref<4x8x8xbf16, #tpu.memory_space<vmem>>, vector<1x8x8xbf16>
    %64 = vector.shape_cast %63 : vector<1x8x8xbf16> to vector<8x8xbf16>
    %cst_36 = arith.constant dense<0.000000e+00> : vector<8x8xf32>
    %65 = tpu.matmul %62, %64, %cst_36 {dimension_numbers = #tpu.dot_dimension_numbers<[1], [1], [0], [0], [0, 0, 1, 0], [], []>} : vector<8x8xbf16>, vector<8x8xbf16>, vector<8x8xf32> -> vector<8x8xf32>
    %66 = vector.broadcast %17 : vector<1x8xf32> to vector<8x8xf32>
    %67 = arith.addf %65, %66 : vector<8x8xf32>
    %cst_37 = arith.constant dense<0xFF800000> : vector<8xf32>
    %68 = vector.multi_reduction <maximumf>, %67, %cst_37 [1] : vector<8x8xf32> to vector<8xf32>
    %69 = vector.shape_cast %68 : vector<8xf32> to vector<8x1xf32>
    %70 = vector.broadcast %69 : vector<8x1xf32> to vector<8x8xf32>
    %71 = arith.subf %67, %70 : vector<8x8xf32>
    %72 = math.exp %71 : vector<8x8xf32>
    %cst_38 = arith.constant dense<0.000000e+00> : vector<8xf32>
    %73 = vector.multi_reduction <add>, %72, %cst_38 [1] : vector<8x8xf32> to vector<8xf32>
    %74 = vector.shape_cast %73 : vector<8xf32> to vector<8x1xf32>
    %75 = tpu.reciprocal %74 {approx = true} : vector<8x1xf32> -> vector<8x1xf32>
    %76 = vector.broadcast %75 : vector<8x1xf32> to vector<8x8xf32>
    %77 = arith.mulf %72, %76 : vector<8x8xf32>
    %78 = arith.truncf %77 : vector<8x8xf32> to vector<8x8xbf16>
    %c2_39 = arith.constant 2 : index
    %c0_40 = arith.constant 0 : index
    %c0_41 = arith.constant 0 : index
    %79 = vector.load %arg22[%c2_39, %c0_40, %c0_41] : memref<4x8x8xbf16, #tpu.memory_space<vmem>>, vector<1x8x8xbf16>
    %80 = vector.shape_cast %79 : vector<1x8x8xbf16> to vector<8x8xbf16>
    %cst_42 = arith.constant dense<0.000000e+00> : vector<8x8xf32>
    %81 = tpu.matmul %78, %80, %cst_42 {dimension_numbers = #tpu.dot_dimension_numbers<[1], [0], [0], [1], [0, 0, 1, 1], [], []>} : vector<8x8xbf16>, vector<8x8xbf16>, vector<8x8xf32> -> vector<8x8xf32>
    %82 = arith.truncf %81 : vector<8x8xf32> to vector<8x8xbf16>
    %c0_43 = arith.constant 0 : index
    %c16 = arith.constant 16 : index
    %83 = vector.load %arg23[%c0_43, %c16] : memref<8x32xbf16, #tpu.memory_space<vmem>>, vector<8x8xbf16>
    tpu.vector_store %arg23[%c0_43, %c16], %82 {strides = array<i32>} : memref<8x32xbf16, #tpu.memory_space<vmem>>, vector<8x8xbf16>,
    %84 = vector.extract_strided_slice %15 {offsets = [0, 24], sizes = [8, 8], strides = [1, 1]} : vector<8x32xbf16> to vector<8x8xbf16>
    %c3 = arith.constant 3 : index
    %c0_44 = arith.constant 0 : index
    %c0_45 = arith.constant 0 : index
    %85 = vector.load %arg21[%c3, %c0_44, %c0_45] : memref<4x8x8xbf16, #tpu.memory_space<vmem>>, vector<1x8x8xbf16>
    %86 = vector.shape_cast %85 : vector<1x8x8xbf16> to vector<8x8xbf16>
    %cst_46 = arith.constant dense<0.000000e+00> : vector<8x8xf32>
    %87 = tpu.matmul %84, %86, %cst_46 {dimension_numbers = #tpu.dot_dimension_numbers<[1], [1], [0], [0], [0, 0, 1, 0], [], []>} : vector<8x8xbf16>, vector<8x8xbf16>, vector<8x8xf32> -> vector<8x8xf32>
    %88 = vector.broadcast %17 : vector<1x8xf32> to vector<8x8xf32>
    %89 = arith.addf %87, %88 : vector<8x8xf32>
    %cst_47 = arith.constant dense<0xFF800000> : vector<8xf32>
    %90 = vector.multi_reduction <maximumf>, %89, %cst_47 [1] : vector<8x8xf32> to vector<8xf32>
    %91 = vector.shape_cast %90 : vector<8xf32> to vector<8x1xf32>
    %92 = vector.broadcast %91 : vector<8x1xf32> to vector<8x8xf32>
    %93 = arith.subf %89, %92 : vector<8x8xf32>
    %94 = math.exp %93 : vector<8x8xf32>
    %cst_48 = arith.constant dense<0.000000e+00> : vector<8xf32>
    %95 = vector.multi_reduction <add>, %94, %cst_48 [1] : vector<8x8xf32> to vector<8xf32>
    %96 = vector.shape_cast %95 : vector<8xf32> to vector<8x1xf32>
    %97 = tpu.reciprocal %96 {approx = true} : vector<8x1xf32> -> vector<8x1xf32>
    %98 = vector.broadcast %97 : vector<8x1xf32> to vector<8x8xf32>
    %99 = arith.mulf %94, %98 : vector<8x8xf32>
    %100 = arith.truncf %99 : vector<8x8xf32> to vector<8x8xbf16>
    %c3_49 = arith.constant 3 : index
    %c0_50 = arith.constant 0 : index
    %c0_51 = arith.constant 0 : index
    %101 = vector.load %arg22[%c3_49, %c0_50, %c0_51] : memref<4x8x8xbf16, #tpu.memory_space<vmem>>, vector<1x8x8xbf16>
    %102 = vector.shape_cast %101 : vector<1x8x8xbf16> to vector<8x8xbf16>
    %cst_52 = arith.constant dense<0.000000e+00> : vector<8x8xf32>
    %103 = tpu.matmul %100, %102, %cst_52 {dimension_numbers = #tpu.dot_dimension_numbers<[1], [0], [0], [1], [0, 0, 1, 1], [], []>} : vector<8x8xbf16>, vector<8x8xbf16>, vector<8x8xf32> -> vector<8x8xf32>
    %104 = arith.truncf %103 : vector<8x8xf32> to vector<8x8xbf16>
    %c0_53 = arith.constant 0 : index
    %c24 = arith.constant 24 : index
    %105 = vector.load %arg23[%c0_53, %c24] : memref<8x32xbf16, #tpu.memory_space<vmem>>, vector<8x8xbf16>
    tpu.vector_store %arg23[%c0_53, %c24], %104 {strides = array<i32>} : memref<8x32xbf16, #tpu.memory_space<vmem>>, vector<8x8xbf16>,
    %c0_54 = arith.constant 0 : index
    %c0_55 = arith.constant 0 : index
    %106 = vector.load %arg23[%c0_54, %c0_55] : memref<8x32xbf16, #tpu.memory_space<vmem>>, vector<8x32xbf16>
    %c0_56 = arith.constant 0 : index
    %c0_57 = arith.constant 0 : index
    %107 = vector.load %arg12[%c0_56, %c0_57] : memref<32x32xbf16, #tpu.memory_space<vmem>>, vector<32x32xbf16>
    %cst_58 = arith.constant dense<0.000000e+00> : vector<8x32xf32>
    %108 = tpu.matmul %106, %107, %cst_58 {dimension_numbers = #tpu.dot_dimension_numbers<[1], [0], [0], [1], [0, 0, 1, 1], [], []>} : vector<8x32xbf16>, vector<32x32xbf16>, vector<8x32xf32> -> vector<8x32xf32>
    %c0_59 = arith.constant 0 : index
    %c0_60 = arith.constant 0 : index
    %109 = vector.load %arg13[%c0_59, %c0_60] : memref<1x32xf32, #tpu.memory_space<vmem>>, vector<1x32xf32>
    %110 = vector.broadcast %109 : vector<1x32xf32> to vector<8x32xf32>
    %111 = arith.addf %108, %110 : vector<8x32xf32>
    %112 = arith.addf %1, %111 : vector<8x32xf32>
    %cst_61 = arith.constant dense<0.000000e+00> : vector<8xf32>
    %113 = vector.multi_reduction <add>, %112, %cst_61 [1] : vector<8x32xf32> to vector<8xf32>
    %114 = vector.shape_cast %113 : vector<8xf32> to vector<8x1xf32>
    %cst_62 = arith.constant 3.200000e+01 : f32
    %115 = vector.broadcast %cst_62 : f32 to vector<8x1xf32>
    %116 = arith.divf %114, %115 : vector<8x1xf32>
    %117 = vector.broadcast %116 : vector<8x1xf32> to vector<8x32xf32>
    %118 = arith.subf %112, %117 : vector<8x32xf32>
    %119 = arith.mulf %118, %118 : vector<8x32xf32>
    %cst_63 = arith.constant dense<0.000000e+00> : vector<8xf32>
    %120 = vector.multi_reduction <add>, %119, %cst_63 [1] : vector<8x32xf32> to vector<8xf32>
    %121 = vector.shape_cast %120 : vector<8xf32> to vector<8x1xf32>
    %cst_64 = arith.constant 3.100000e+01 : f32
    %122 = vector.broadcast %cst_64 : f32 to vector<8x1xf32>
    %123 = arith.divf %121, %122 : vector<8x1xf32>
    %124 = math.sqrt %123 : vector<8x1xf32>
    %cst_65 = arith.constant 9.99999997E-7 : f32
    %125 = vector.broadcast %cst_65 : f32 to vector<8x1xf32>
    %126 = arith.addf %124, %125 : vector<8x1xf32>
    %127 = tpu.reciprocal %126 {approx = true} : vector<8x1xf32> -> vector<8x1xf32>
    %c0_66 = arith.constant 0 : index
    %c0_67 = arith.constant 0 : index
    %128 = vector.load %arg14[%c0_66, %c0_67] : memref<1x32xf32, #tpu.memory_space<vmem>>, vector<1x32xf32>
    %129 = vector.broadcast %116 : vector<8x1xf32> to vector<8x32xf32>
    %130 = arith.subf %112, %129 : vector<8x32xf32>
    %131 = vector.broadcast %128 : vector<1x32xf32> to vector<8x32xf32>
    %132 = arith.mulf %131, %130 : vector<8x32xf32>
    %133 = vector.broadcast %127 : vector<8x1xf32> to vector<8x32xf32>
    %134 = arith.mulf %132, %133 : vector<8x32xf32>
    %c0_68 = arith.constant 0 : index
    %c0_69 = arith.constant 0 : index
    %135 = vector.load %arg15[%c0_68, %c0_69] : memref<1x32xf32, #tpu.memory_space<vmem>>, vector<1x32xf32>
    %136 = vector.broadcast %135 : vector<1x32xf32> to vector<8x32xf32>
    %137 = arith.addf %134, %136 : vector<8x32xf32>
    %138 = arith.truncf %137 : vector<8x32xf32> to vector<8x32xbf16>
    %c0_70 = arith.constant 0 : index
    %c0_71 = arith.constant 0 : index
    %139 = vector.load %arg16[%c0_70, %c0_71] : memref<32x64xbf16, #tpu.memory_space<vmem>>, vector<32x64xbf16>
    %cst_72 = arith.constant dense<0.000000e+00> : vector<8x64xf32>
    %140 = tpu.matmul %138, %139, %cst_72 {dimension_numbers = #tpu.dot_dimension_numbers<[1], [0], [0], [1], [0, 0, 1, 1], [], []>} : vector<8x32xbf16>, vector<32x64xbf16>, vector<8x64xf32> -> vector<8x64xf32>
    %c0_73 = arith.constant 0 : index
    %c0_74 = arith.constant 0 : index
    %141 = vector.load %arg17[%c0_73, %c0_74] : memref<1x64xf32, #tpu.memory_space<vmem>>, vector<1x64xf32>
    %142 = vector.broadcast %141 : vector<1x64xf32> to vector<8x64xf32>
    %143 = arith.addf %140, %142 : vector<8x64xf32>
    %cst_75 = arith.constant 0.000000e+00 : f32
    %144 = vector.broadcast %cst_75 : f32 to vector<8x64xf32>
    %145 = arith.maximumf %143, %144 : vector<8x64xf32>
    %146 = arith.truncf %145 : vector<8x64xf32> to vector<8x64xbf16>
    %c0_76 = arith.constant 0 : index
    %c0_77 = arith.constant 0 : index
    %147 = vector.load %arg18[%c0_76, %c0_77] : memref<64x32xbf16, #tpu.memory_space<vmem>>, vector<64x32xbf16>
    %cst_78 = arith.constant dense<0.000000e+00> : vector<8x32xf32>
    %148 = tpu.matmul %146, %147, %cst_78 {dimension_numbers = #tpu.dot_dimension_numbers<[1], [0], [0], [1], [0, 0, 1, 1], [], []>} : vector<8x64xbf16>, vector<64x32xbf16>, vector<8x32xf32> -> vector<8x32xf32>
    %c0_79 = arith.constant 0 : index
    %c0_80 = arith.constant 0 : index
    %149 = vector.load %arg19[%c0_79, %c0_80] : memref<1x32xf32, #tpu.memory_space<vmem>>, vector<1x32xf32>
    %150 = vector.broadcast %149 : vector<1x32xf32> to vector<8x32xf32>
    %151 = arith.addf %148, %150 : vector<8x32xf32>
    %152 = arith.addf %112, %151 : vector<8x32xf32>
    %c0_81 = arith.constant 0 : index
    %c0_82 = arith.constant 0 : index
    %c0_83 = arith.constant 0 : index
    %153 = vector.load %arg20[%c0_81, %c0_82, %c0_83] : memref<1x8x32xf32, #tpu.memory_space<vmem>>, vector<1x8x32xf32>
    %154 = vector.shape_cast %153 : vector<1x8x32xf32> to vector<8x32xf32>
    %155 = vector.shape_cast %152 : vector<8x32xf32> to vector<1x8x32xf32>
    tpu.vector_store %arg20[%c0_81, %c0_82, %c0_83], %155 {strides = array<i32>} : memref<1x8x32xf32, #tpu.memory_space<vmem>>, vector<1x8x32xf32>,
    return
  }
  func.func @transform_0(%arg0: i32, %arg1: i32, %arg2: i32) -> (i32, i32, i32) {
    %c1_i32 = arith.constant 1 : i32
    %0 = arith.muli %arg1, %c1_i32 : i32
    %1 = arith.addi %0, %arg2 : i32
    %c0_i32 = arith.constant 0 : i32
    %c0_i32_0 = arith.constant 0 : i32
    return %arg0, %1, %c0_i32 : i32, i32, i32
  }
  func.func @transform_1(%arg0: i32, %arg1: i32, %arg2: i32) -> (i32, i32, i32) {
    %c0_i32 = arith.constant 0 : i32
    %c0_i32_0 = arith.constant 0 : i32
    %c0_i32_1 = arith.constant 0 : i32
    return %arg0, %c0_i32, %c0_i32_0 : i32, i32, i32
  }
  func.func @transform_2(%arg0: i32, %arg1: i32, %arg2: i32) -> (i32, i32, i32) {
    %c0_i32 = arith.constant 0 : i32
    %c0_i32_0 = arith.constant 0 : i32
    %c0_i32_1 = arith.constant 0 : i32
    return %arg0, %c0_i32, %c0_i32_0 : i32, i32, i32
  }
  func.func @transform_3(%arg0: i32, %arg1: i32, %arg2: i32) -> (i32, i32) {
    %c0_i32 = arith.constant 0 : i32
    %c0_i32_0 = arith.constant 0 : i32
    %c0_i32_1 = arith.constant 0 : i32
    return %c0_i32, %c0_i32_0 : i32, i32
  }
  func.func @transform_4(%arg0: i32, %arg1: i32, %arg2: i32) -> (i32, i32) {
    %c0_i32 = arith.constant 0 : i32
    %c0_i32_0 = arith.constant 0 : i32
    %c0_i32_1 = arith.constant 0 : i32
    return %c0_i32, %c0_i32_0 : i32, i32
  }
  func.func @transform_5(%arg0: i32, %arg1: i32, %arg2: i32) -> (i32, i32) {
    %c0_i32 = arith.constant 0 : i32
    %c0_i32_0 = arith.constant 0 : i32
    %c0_i32_1 = arith.constant 0 : i32
    return %c0_i32, %c0_i32_0 : i32, i32
  }
  func.func @transform_6(%arg0: i32, %arg1: i32, %arg2: i32) -> (i32, i32) {
    %c0_i32 = arith.constant 0 : i32
    %c0_i32_0 = arith.constant 0 : i32
    %c0_i32_1 = arith.constant 0 : i32
    return %c0_i32, %c0_i32_0 : i32, i32
  }
  func.func @transform_7(%arg0: i32, %arg1: i32, %arg2: i32) -> (i32, i32) {
    %c0_i32 = arith.constant 0 : i32
    %c0_i32_0 = arith.constant 0 : i32
    %c0_i32_1 = arith.constant 0 : i32
    return %c0_i32, %c0_i32_0 : i32, i32
  }
  func.func @transform_8(%arg0: i32, %arg1: i32, %arg2: i32) -> (i32, i32) {
    %c0_i32 = arith.constant 0 : i32
    %c0_i32_0 = arith.constant 0 : i32
    %c0_i32_1 = arith.constant 0 : i32
    return %c0_i32, %c0_i32_0 : i32, i32
  }
  func.func @transform_9(%arg0: i32, %arg1: i32, %arg2: i32) -> (i32, i32) {
    %c0_i32 = arith.constant 0 : i32
    %c0_i32_0 = arith.constant 0 : i32
    %c0_i32_1 = arith.constant 0 : i32
    return %c0_i32, %c0_i32_0 : i32, i32
  }
  func.func @transform_10(%arg0: i32, %arg1: i32, %arg2: i32) -> (i32, i32) {
    %c0_i32 = arith.constant 0 : i32
    %c0_i32_0 = arith.constant 0 : i32
    %c0_i32_1 = arith.constant 0 : i32
    return %c0_i32, %c0_i32_0 : i32, i32
  }
  func.func @transform_11(%arg0: i32, %arg1: i32, %arg2: i32) -> (i32, i32) {
    %c0_i32 = arith.constant 0 : i32
    %c0_i32_0 = arith.constant 0 : i32
    %c0_i32_1 = arith.constant 0 : i32
    return %c0_i32, %c0_i32_0 : i32, i32
  }
  func.func @transform_12(%arg0: i32, %arg1: i32, %arg2: i32) -> (i32, i32) {
    %c0_i32 = arith.constant 0 : i32
    %c0_i32_0 = arith.constant 0 : i32
    %c0_i32_1 = arith.constant 0 : i32
    return %c0_i32, %c0_i32_0 : i32, i32
  }
  func.func @transform_13(%arg0: i32, %arg1: i32, %arg2: i32) -> (i32, i32) {
    %c0_i32 = arith.constant 0 : i32
    %c0_i32_0 = arith.constant 0 : i32
    %c0_i32_1 = arith.constant 0 : i32
    return %c0_i32, %c0_i32_0 : i32, i32
  }
  func.func @transform_14(%arg0: i32, %arg1: i32, %arg2: i32) -> (i32, i32) {
    %c0_i32 = arith.constant 0 : i32
    %c0_i32_0 = arith.constant 0 : i32
    %c0_i32_1 = arith.constant 0 : i32
    return %c0_i32, %c0_i32_0 : i32, i32
  }
  func.func @transform_15(%arg0: i32, %arg1: i32, %arg2: i32) -> (i32, i32) {
    %c0_i32 = arith.constant 0 : i32
    %c0_i32_0 = arith.constant 0 : i32
    %c0_i32_1 = arith.constant 0 : i32
    return %c0_i32, %c0_i32_0 : i32, i32
  }
  func.func @transform_16(%arg0: i32, %arg1: i32, %arg2: i32) -> (i32, i32) {
    %c0_i32 = arith.constant 0 : i32
    %c0_i32_0 = arith.constant 0 : i32
    %c0_i32_1 = arith.constant 0 : i32
    return %c0_i32, %c0_i32_0 : i32, i32
  }
  func.func @transform_17(%arg0: i32, %arg1: i32, %arg2: i32) -> (i32, i32, i32) {
    %c1_i32 = arith.constant 1 : i32
    %0 = arith.muli %arg1, %c1_i32 : i32
    %1 = arith.addi %0, %arg2 : i32
    %c0_i32 = arith.constant 0 : i32
    %c0_i32_0 = arith.constant 0 : i32
    return %arg0, %1, %c0_i32 : i32, i32, i32
  }
}

</mosaic_0001>

<llo_original>
// kernel: tpu_custom_call.1
$region0: #{tpu_custom_call.1}
  #allocation0 [shape = 'u32[]', space=smem, size = 0x4, offset = 0x4, fixed_abs, tag = 'smem constant byte address 0x4 - core index']
  #allocation1 [shape = 'u32[72,128]{1,0:T(1,128)}', space=vmem, size = 0x9000, scoped, tag = 'internal scratch']
  #allocation2 [shape = 'bf16[4,8,8]{2,1,0:T(8,128)(2,1)}', space=vmem, size = 0x2000, scoped, tag = 'scratch operand']
  #allocation3 [shape = 'bf16[4,8,8]{2,1,0:T(8,128)(2,1)}', space=vmem, size = 0x2000, scoped, tag = 'scratch operand']
  #allocation4 [shape = 'bf16[8,32]{1,0:T(8,128)(2,1)}', space=vmem, size = 0x800, scoped, tag = 'scratch operand']
  %s0 = inlined_call_operand.vmem [shape: f32[2,8,32], index: 0, kind: input, shape index: {}]
  %s1 = inlined_call_operand.hbm [shape: bf16[2,8,32], index: 1, kind: input, shape index: {}]
  %s2 = inlined_call_operand.hbm [shape: f32[2,1,8], index: 2, kind: input, shape index: {}]
  %s3 = inlined_call_operand.vmem [shape: bf16[32,32], index: 3, kind: input, shape index: {}]
  %s4 = inlined_call_operand.vmem [shape: f32[1,32], index: 4, kind: input, shape index: {}]
  %s5 = inlined_call_operand.vmem [shape: bf16[32,32], index: 5, kind: input, shape index: {}]
  %s6 = inlined_call_operand.vmem [shape: f32[1,32], index: 6, kind: input, shape index: {}]
  %s7 = inlined_call_operand.hbm [shape: bf16[32,32], index: 7, kind: input, shape index: {}]
  %s8 = inlined_call_operand.vmem [shape: f32[1,32], index: 8, kind: input, shape index: {}]
  %s9 = inlined_call_operand.hbm [shape: bf16[32,32], index: 9, kind: input, shape index: {}]
  %s10 = inlined_call_operand.vmem [shape: f32[1,32], index: 10, kind: input, shape index: {}]
  %s11 = inlined_call_operand.vmem [shape: f32[1,32], index: 11, kind: input, shape index: {}]
  %s12 = inlined_call_operand.vmem [shape: f32[1,32], index: 12, kind: input, shape index: {}]
  %s13 = inlined_call_operand.hbm [shape: bf16[32,64], index: 13, kind: input, shape index: {}]
  %s14 = inlined_call_operand.vmem [shape: f32[1,64], index: 14, kind: input, shape index: {}]
  %s15 = inlined_call_operand.vmem [shape: bf16[64,32], index: 15, kind: input, shape index: {}]
  %s16 = inlined_call_operand.vmem [shape: f32[1,32], index: 16, kind: input, shape index: {}]
  %s17 = inlined_call_operand.hbm [shape: f32[2,8,32], index: 17, kind: output, shape index: {}]
  %s18 = sld [smem:[#allocation0]]
  $region125: #{tpu_custom_call.1} parent=0
    _
  %s20 = ssub.s32 1, %s18
  %s21 = scalar_select 0, %s20, %s18
  $region1: #{tpu_custom_call.1} parent=0
    #allocation5 [shape = 'u8[4096]{0}', space=vmem, size = 0x1000, scoped, tag = 'input window, operand 1']
    #allocation6 [shape = 's32[2]{0}', space=sflag, size = 0x8, scoped, tag = 'scoped memory for tpu_custom_call.1']
    #allocation7 [shape = 's32[2]{0}', space=sflag, size = 0x8, scoped, tag = 'scoped memory for tpu_custom_call.1']
    #allocation8 [shape = 'u8[1024]{0}', space=vmem, size = 0x400, scoped, tag = 'input window, operand 2']
    #allocation9 [shape = 's32[2]{0}', space=sflag, size = 0x8, scoped, tag = 'scoped memory for tpu_custom_call.1']
    #allocation10 [shape = 'u8[8192]{0}', space=vmem, size = 0x2000, scoped, tag = 'input window, operand 7, single buffered']
    #allocation11 [shape = 'u8[8192]{0}', space=vmem, size = 0x2000, scoped, tag = 'input window, operand 9, single buffered']
    #allocation12 [shape = 's32[1]{0}', space=sflag, size = 0x4, scoped, tag = 'scoped memory for tpu_custom_call.1']
    #allocation13 [shape = 'u8[8192]{0}', space=vmem, size = 0x2000, scoped, tag = 'input window, operand 13, single buffered']
    #allocation14 [shape = 'u8[8192]{0}', space=vmem, size = 0x2000, scoped, tag = 'output window, operand 0']
    %22 = vsyncpa [#allocation6], 0
    %s23 = scalar_lea.sflag [#allocation6], 1
    %24 = vsyncpa %s23, 0
    %25 = vsyncpa [#allocation9], 0
    %s26 = scalar_lea.sflag [#allocation9], 1
    %27 = vsyncpa %s26, 0
    %28 = vsyncpa [#allocation12], 0
    %29 = vsyncpa [#allocation7], 0
    %s30 = scalar_lea.sflag [#allocation7], 1
    %31 = vsyncpa %s30, 0
    loop: start=0, step=1, limit=4
    $region2: #{tpu_custom_call.1} parent=1 // loop_pre_header
      _
    $region3: #{tpu_custom_call.1} parent=1 // loop_header
      %s33 = sphi 0, %s37
      %p34 = scmp.ge.s32.totalorder %s33, 4
      %s40 = sphi 0, %s59
      %s41 = sphi 0, %s55
      %s42 = sphi 0, %s51
      %s43 = sphi 0, %s40
      %s44 = sphi 0, %s41
      %s45 = sphi 0, %s42
      %s46 = sphi 0, %s43
      %s47 = sphi 0, %s44
      %s48 = sphi 0, %s45
      %s66 = sphi 0, %s68
      %s69 = sphi 0, %s66
      %s70 = sphi 0, %s69
      %s86 = sphi 0, %s70
      %s92 = sphi 0, %s94
      %s95 = sphi 0, %s92
      %s96 = sphi 0, %s95
      %s112 = sphi 0, %s96
      %s118 = sphi 0, %s120
      %s121 = sphi 0, %s118
      %s122 = sphi 0, %s121
      %s138 = sphi 0, %s122
      %s142 = sphi 0, %s142
      %s144 = sphi 0, %s142
      %s145 = sphi 0, %s144
      %s159 = sphi 0, %s145
      %s163 = sphi 0, %s163
      %s165 = sphi 0, %s163
      %s166 = sphi 0, %s165
      %s180 = sphi 0, %s166
      %s184 = sphi 0, %s184
      %s186 = sphi 0, %s184
      %s187 = sphi 0, %s186
      %s201 = sphi 0, %s187
      %s205 = sphi 0, %s205
      %s207 = sphi 0, %s205
      %s208 = sphi 0, %s207
      %s222 = sphi 0, %s208
      %s226 = sphi 0, %s226
      %s228 = sphi 0, %s226
      %s229 = sphi 0, %s228
      %s243 = sphi 0, %s229
      %s247 = sphi 0, %s247
      %s249 = sphi 0, %s247
      %s250 = sphi 0, %s249
      %s264 = sphi 0, %s250
      %s268 = sphi 0, %s268
      %s270 = sphi 0, %s268
      %s271 = sphi 0, %s270
      %s285 = sphi 0, %s271
      %s289 = sphi 0, %s289
      %s291 = sphi 0, %s289
      %s292 = sphi 0, %s291
      %s306 = sphi 0, %s292
      %s310 = sphi 0, %s310
      %s312 = sphi 0, %s310
      %s313 = sphi 0, %s312
      %s327 = sphi 0, %s313
      %s331 = sphi 0, %s331
      %s333 = sphi 0, %s331
      %s334 = sphi 0, %s333
      %s348 = sphi 0, %s334
      %s352 = sphi 0, %s352
      %s354 = sphi 0, %s352
      %s355 = sphi 0, %s354
      %s369 = sphi 0, %s355
      %s373 = sphi 0, %s373
      %s375 = sphi 0, %s373
      %s376 = sphi 0, %s375
      %s390 = sphi 0, %s376
      %s394 = sphi 0, %s394
      %s396 = sphi 0, %s394
      %s397 = sphi 0, %s396
      %s411 = sphi 0, %s397
      %s415 = sphi 0, %s415
      %s417 = sphi 0, %s415
      %s418 = sphi 0, %s417
      %s432 = sphi 0, %s418
      %s442 = sphi 0, %s444
      %s445 = sphi 0, %s442
      %s446 = sphi 0, %s445
      %s462 = sphi 0, %s446
    $region4: #{tpu_custom_call.1} parent=1 // loop_header_branch
      %36 = sbr.rel (%p34) target = $region8
    $region5: #{tpu_custom_call.1} parent=1 // loop_body
      %s38 = ssub.s32 %s33, 1
      %s39 = ssub.s32 %s33, 2
      %s49 = sadd.s32 1, %s42
      %p50 = scmp.ge.s32.totalorder %s49, 1
      %s51 = scalar_select %p50, 0, %s49
      %s52 = sadd.s32 1, %s41
      %s53 = scalar_select %p50, %s52, %s41
      %p54 = scmp.ge.s32.totalorder %s53, 1
      %s55 = scalar_select %p54, 0, %s53
      %s56 = sadd.s32 1, %s40
      %s57 = scalar_select %p54, %s56, %s40
      %p58 = scmp.ge.s32.totalorder %s57, 2
      %s59 = scalar_select %p58, 0, %s57
      %s60 = sadd.s32 %s41, %s42
      %s61 = sadd.s32 %s55, %s51
      %s62 = ssub.s32 %s40, %s59
      %s63 = ssub.s32 %s60, %s61
      %s64 = sor.u32 %s62, %s63
      %p65 = scmp.eq.s32.totalorder %s64, 0
      %s67 = sadd.s32 %s66, 1
      %s68 = scalar_select %p65, %s66, %s67
      %p71 = pneg %p65
      %p72 = scmp.eq.s32.totalorder %s33, 1
      %p73 = por %p71, %p72
      %p74 = scmp.ne.s32.totalorder %s66, %s69
      %p75 = scmp.eq.s32.totalorder %s33, 0
      %p76 = por %p74, %p75
      %p77 = scmp.ne.s32.totalorder %s66, %s69
      %p78 = scmp.eq.s32.totalorder %s38, 1
      %p79 = por %p77, %p78
      %p80 = scmp.ne.s32.totalorder %s69, %s70
      %p81 = scmp.eq.s32.totalorder %s38, 0
      %p82 = por %p80, %p81
      %p83 = scmp.ne.s32.totalorder %s69, %s70
      %p84 = scmp.eq.s32.totalorder %s39, 1
      %p85 = por %p83, %p84
      %p87 = scmp.ne.s32.totalorder %s70, %s86
      %p88 = scmp.eq.s32.totalorder %s39, 0
      %p89 = por %p87, %p88
      %s90 = ssub.s32 %s40, %s59
      %p91 = scmp.eq.s32.totalorder %s90, 0
      %s93 = sadd.s32 %s92, 1
      %s94 = scalar_select %p91, %s92, %s93
      %p97 = pneg %p91
      %p98 = scmp.eq.s32.totalorder %s33, 1
      %p99 = por %p97, %p98
      %p100 = scmp.ne.s32.totalorder %s92, %s95
      %p101 = scmp.eq.s32.totalorder %s33, 0
      %p102 = por %p100, %p101
      %p103 = scmp.ne.s32.totalorder %s92, %s95
      %p104 = scmp.eq.s32.totalorder %s38, 1
      %p105 = por %p103, %p104
      %p106 = scmp.ne.s32.totalorder %s95, %s96
      %p107 = scmp.eq.s32.totalorder %s38, 0
      %p108 = por %p106, %p107
      %p109 = scmp.ne.s32.totalorder %s95, %s96
      %p110 = scmp.eq.s32.totalorder %s39, 1
      %p111 = por %p109, %p110
      %p113 = scmp.ne.s32.totalorder %s96, %s112
      %p114 = scmp.eq.s32.totalorder %s39, 0
      %p115 = por %p113, %p114
      %s116 = ssub.s32 %s40, %s59
      %p117 = scmp.eq.s32.totalorder %s116, 0
      %s119 = sadd.s32 %s118, 1
      %s120 = scalar_select %p117, %s118, %s119
      %p123 = pneg %p117
      %p124 = scmp.eq.s32.totalorder %s33, 1
      %p125 = por %p123, %p124
      %p126 = scmp.ne.s32.totalorder %s118, %s121
      %p127 = scmp.eq.s32.totalorder %s33, 0
      %p128 = por %p126, %p127
      %p129 = scmp.ne.s32.totalorder %s118, %s121
      %p130 = scmp.eq.s32.totalorder %s38, 1
      %p131 = por %p129, %p130
      %p132 = scmp.ne.s32.totalorder %s121, %s122
      %p133 = scmp.eq.s32.totalorder %s38, 0
      %p134 = por %p132, %p133
      %p135 = scmp.ne.s32.totalorder %s121, %s122
      %p136 = scmp.eq.s32.totalorder %s39, 1
      %p137 = por %p135, %p136
      %p139 = scmp.ne.s32.totalorder %s122, %s138
      %p140 = scmp.eq.s32.totalorder %s39, 0
      %p141 = por %p139, %p140
      %s143 = sadd.s32 %s142, 1
      %p146 = scmp.eq.s32.totalorder %s33, 1
      %p147 = scmp.ne.s32.totalorder %s142, %s144
      %p148 = scmp.eq.s32.totalorder %s33, 0
      %p149 = por %p147, %p148
      %p150 = scmp.ne.s32.totalorder %s142, %s144
      %p151 = scmp.eq.s32.totalorder %s38, 1
      %p152 = por %p150, %p151
      %p153 = scmp.ne.s32.totalorder %s144, %s145
      %p154 = scmp.eq.s32.totalorder %s38, 0
      %p155 = por %p153, %p154
      %p156 = scmp.ne.s32.totalorder %s144, %s145
      %p157 = scmp.eq.s32.totalorder %s39, 1
      %p158 = por %p156, %p157
      %p160 = scmp.ne.s32.totalorder %s145, %s159
      %p161 = scmp.eq.s32.totalorder %s39, 0
      %p162 = por %p160, %p161
      %s164 = sadd.s32 %s163, 1
      %p167 = scmp.eq.s32.totalorder %s33, 1
      %p168 = scmp.ne.s32.totalorder %s163, %s165
      %p169 = scmp.eq.s32.totalorder %s33, 0
      %p170 = por %p168, %p169
      %p171 = scmp.ne.s32.totalorder %s163, %s165
      %p172 = scmp.eq.s32.totalorder %s38, 1
      %p173 = por %p171, %p172
      %p174 = scmp.ne.s32.totalorder %s165, %s166
      %p175 = scmp.eq.s32.totalorder %s38, 0
      %p176 = por %p174, %p175
      %p177 = scmp.ne.s32.totalorder %s165, %s166
      %p178 = scmp.eq.s32.totalorder %s39, 1
      %p179 = por %p177, %p178
      %p181 = scmp.ne.s32.totalorder %s166, %s180
      %p182 = scmp.eq.s32.totalorder %s39, 0
      %p183 = por %p181, %p182
      %s185 = sadd.s32 %s184, 1
      %p188 = scmp.eq.s32.totalorder %s33, 1
      %p189 = scmp.ne.s32.totalorder %s184, %s186
      %p190 = scmp.eq.s32.totalorder %s33, 0
      %p191 = por %p189, %p190
      %p192 = scmp.ne.s32.totalorder %s184, %s186
      %p193 = scmp.eq.s32.totalorder %s38, 1
      %p194 = por %p192, %p193
      %p195 = scmp.ne.s32.totalorder %s186, %s187
      %p196 = scmp.eq.s32.totalorder %s38, 0
      %p197 = por %p195, %p196
      %p198 = scmp.ne.s32.totalorder %s186, %s187
      %p199 = scmp.eq.s32.totalorder %s39, 1
      %p200 = por %p198, %p199
      %p202 = scmp.ne.s32.totalorder %s187, %s201
      %p203 = scmp.eq.s32.totalorder %s39, 0
      %p204 = por %p202, %p203
      %s206 = sadd.s32 %s205, 1
      %p209 = scmp.eq.s32.totalorder %s33, 1
      %p210 = scmp.ne.s32.totalorder %s205, %s207
      %p211 = scmp.eq.s32.totalorder %s33, 0
      %p212 = por %p210, %p211
      %p213 = scmp.ne.s32.totalorder %s205, %s207
      %p214 = scmp.eq.s32.totalorder %s38, 1
      %p215 = por %p213, %p214
      %p216 = scmp.ne.s32.totalorder %s207, %s208
      %p217 = scmp.eq.s32.totalorder %s38, 0
      %p218 = por %p216, %p217
      %p219 = scmp.ne.s32.totalorder %s207, %s208
      %p220 = scmp.eq.s32.totalorder %s39, 1
      %p221 = por %p219, %p220
      %p223 = scmp.ne.s32.totalorder %s208, %s222
      %p224 = scmp.eq.s32.totalorder %s39, 0
      %p225 = por %p223, %p224
      %s227 = sadd.s32 %s226, 1
      %p230 = scmp.eq.s32.totalorder %s33, 1
      %p231 = scmp.ne.s32.totalorder %s226, %s228
      %p232 = scmp.eq.s32.totalorder %s33, 0
      %p233 = por %p231, %p232
      %p234 = scmp.ne.s32.totalorder %s226, %s228
      %p235 = scmp.eq.s32.totalorder %s38, 1
      %p236 = por %p234, %p235
      %p237 = scmp.ne.s32.totalorder %s228, %s229
      %p238 = scmp.eq.s32.totalorder %s38, 0
      %p239 = por %p237, %p238
      %p240 = scmp.ne.s32.totalorder %s228, %s229
      %p241 = scmp.eq.s32.totalorder %s39, 1
      %p242 = por %p240, %p241
      %p244 = scmp.ne.s32.totalorder %s229, %s243
      %p245 = scmp.eq.s32.totalorder %s39, 0
      %p246 = por %p244, %p245
      %s248 = sadd.s32 %s247, 1
      %p251 = scmp.eq.s32.totalorder %s33, 1
      %p252 = scmp.ne.s32.totalorder %s247, %s249
      %p253 = scmp.eq.s32.totalorder %s33, 0
      %p254 = por %p252, %p253
      %p255 = scmp.ne.s32.totalorder %s247, %s249
      %p256 = scmp.eq.s32.totalorder %s38, 1
      %p257 = por %p255, %p256
      %p258 = scmp.ne.s32.totalorder %s249, %s250
      %p259 = scmp.eq.s32.totalorder %s38, 0
      %p260 = por %p258, %p259
      %p261 = scmp.ne.s32.totalorder %s249, %s250
      %p262 = scmp.eq.s32.totalorder %s39, 1
      %p263 = por %p261, %p262
      %p265 = scmp.ne.s32.totalorder %s250, %s264
      %p266 = scmp.eq.s32.totalorder %s39, 0
      %p267 = por %p265, %p266
      %s269 = sadd.s32 %s268, 1
      %p272 = scmp.eq.s32.totalorder %s33, 1
      %p273 = scmp.ne.s32.totalorder %s268, %s270
      %p274 = scmp.eq.s32.totalorder %s33, 0
      %p275 = por %p273, %p274
      %p276 = scmp.ne.s32.totalorder %s268, %s270
      %p277 = scmp.eq.s32.totalorder %s38, 1
      %p278 = por %p276, %p277
      %p279 = scmp.ne.s32.totalorder %s270, %s271
      %p280 = scmp.eq.s32.totalorder %s38, 0
      %p281 = por %p279, %p280
      %p282 = scmp.ne.s32.totalorder %s270, %s271
      %p283 = scmp.eq.s32.totalorder %s39, 1
      %p284 = por %p282, %p283
      %p286 = scmp.ne.s32.totalorder %s271, %s285
      %p287 = scmp.eq.s32.totalorder %s39, 0
      %p288 = por %p286, %p287
      %s290 = sadd.s32 %s289, 1
      %p293 = scmp.eq.s32.totalorder %s33, 1
      %p294 = scmp.ne.s32.totalorder %s289, %s291
      %p295 = scmp.eq.s32.totalorder %s33, 0
      %p296 = por %p294, %p295
      %p297 = scmp.ne.s32.totalorder %s289, %s291
      %p298 = scmp.eq.s32.totalorder %s38, 1
      %p299 = por %p297, %p298
      %p300 = scmp.ne.s32.totalorder %s291, %s292
      %p301 = scmp.eq.s32.totalorder %s38, 0
      %p302 = por %p300, %p301
      %p303 = scmp.ne.s32.totalorder %s291, %s292
      %p304 = scmp.eq.s32.totalorder %s39, 1
      %p305 = por %p303, %p304
      %p307 = scmp.ne.s32.totalorder %s292, %s306
      %p308 = scmp.eq.s32.totalorder %s39, 0
      %p309 = por %p307, %p308
      %s311 = sadd.s32 %s310, 1
      %p314 = scmp.eq.s32.totalorder %s33, 1
      %p315 = scmp.ne.s32.totalorder %s310, %s312
      %p316 = scmp.eq.s32.totalorder %s33, 0
      %p317 = por %p315, %p316
      %p318 = scmp.ne.s32.totalorder %s310, %s312
      %p319 = scmp.eq.s32.totalorder %s38, 1
      %p320 = por %p318, %p319
      %p321 = scmp.ne.s32.totalorder %s312, %s313
      %p322 = scmp.eq.s32.totalorder %s38, 0
      %p323 = por %p321, %p322
      %p324 = scmp.ne.s32.totalorder %s312, %s313
      %p325 = scmp.eq.s32.totalorder %s39, 1
      %p326 = por %p324, %p325
      %p328 = scmp.ne.s32.totalorder %s313, %s327
      %p329 = scmp.eq.s32.totalorder %s39, 0
      %p330 = por %p328, %p329
      %s332 = sadd.s32 %s331, 1
      %p335 = scmp.eq.s32.totalorder %s33, 1
      %p336 = scmp.ne.s32.totalorder %s331, %s333
      %p337 = scmp.eq.s32.totalorder %s33, 0
      %p338 = por %p336, %p337
      %p339 = scmp.ne.s32.totalorder %s331, %s333
      %p340 = scmp.eq.s32.totalorder %s38, 1
      %p341 = por %p339, %p340
      %p342 = scmp.ne.s32.totalorder %s333, %s334
      %p343 = scmp.eq.s32.totalorder %s38, 0
      %p344 = por %p342, %p343
      %p345 = scmp.ne.s32.totalorder %s333, %s334
      %p346 = scmp.eq.s32.totalorder %s39, 1
      %p347 = por %p345, %p346
      %p349 = scmp.ne.s32.totalorder %s334, %s348
      %p350 = scmp.eq.s32.totalorder %s39, 0
      %p351 = por %p349, %p350
      %s353 = sadd.s32 %s352, 1
      %p356 = scmp.eq.s32.totalorder %s33, 1
      %p357 = scmp.ne.s32.totalorder %s352, %s354
      %p358 = scmp.eq.s32.totalorder %s33, 0
      %p359 = por %p357, %p358
      %p360 = scmp.ne.s32.totalorder %s352, %s354
      %p361 = scmp.eq.s32.totalorder %s38, 1
      %p362 = por %p360, %p361
      %p363 = scmp.ne.s32.totalorder %s354, %s355
      %p364 = scmp.eq.s32.totalorder %s38, 0
      %p365 = por %p363, %p364
      %p366 = scmp.ne.s32.totalorder %s354, %s355
      %p367 = scmp.eq.s32.totalorder %s39, 1
      %p368 = por %p366, %p367
      %p370 = scmp.ne.s32.totalorder %s355, %s369
      %p371 = scmp.eq.s32.totalorder %s39, 0
      %p372 = por %p370, %p371
      %s374 = sadd.s32 %s373, 1
      %p377 = scmp.eq.s32.totalorder %s33, 1
      %p378 = scmp.ne.s32.totalorder %s373, %s375
      %p379 = scmp.eq.s32.totalorder %s33, 0
      %p380 = por %p378, %p379
      %p381 = scmp.ne.s32.totalorder %s373, %s375
      %p382 = scmp.eq.s32.totalorder %s38, 1
      %p383 = por %p381, %p382
      %p384 = scmp.ne.s32.totalorder %s375, %s376
      %p385 = scmp.eq.s32.totalorder %s38, 0
      %p386 = por %p384, %p385
      %p387 = scmp.ne.s32.totalorder %s375, %s376
      %p388 = scmp.eq.s32.totalorder %s39, 1
      %p389 = por %p387, %p388
      %p391 = scmp.ne.s32.totalorder %s376, %s390
      %p392 = scmp.eq.s32.totalorder %s39, 0
      %p393 = por %p391, %p392
      %s395 = sadd.s32 %s394, 1
      %p398 = scmp.eq.s32.totalorder %s33, 1
      %p399 = scmp.ne.s32.totalorder %s394, %s396
      %p400 = scmp.eq.s32.totalorder %s33, 0
      %p401 = por %p399, %p400
      %p402 = scmp.ne.s32.totalorder %s394, %s396
      %p403 = scmp.eq.s32.totalorder %s38, 1
      %p404 = por %p402, %p403
      %p405 = scmp.ne.s32.totalorder %s396, %s397
      %p406 = scmp.eq.s32.totalorder %s38, 0
      %p407 = por %p405, %p406
      %p408 = scmp.ne.s32.totalorder %s396, %s397
      %p409 = scmp.eq.s32.totalorder %s39, 1
      %p410 = por %p408, %p409
      %p412 = scmp.ne.s32.totalorder %s397, %s411
      %p413 = scmp.eq.s32.totalorder %s39, 0
      %p414 = por %p412, %p413
      %s416 = sadd.s32 %s415, 1
      %p419 = scmp.eq.s32.totalorder %s33, 1
      %p420 = scmp.ne.s32.totalorder %s415, %s417
      %p421 = scmp.eq.s32.totalorder %s33, 0
      %p422 = por %p420, %p421
      %p423 = scmp.ne.s32.totalorder %s415, %s417
      %p424 = scmp.eq.s32.totalorder %s38, 1
      %p425 = por %p423, %p424
      %p426 = scmp.ne.s32.totalorder %s417, %s418
      %p427 = scmp.eq.s32.totalorder %s38, 0
      %p428 = por %p426, %p427
      %p429 = scmp.ne.s32.totalorder %s417, %s418
      %p430 = scmp.eq.s32.totalorder %s39, 1
      %p431 = por %p429, %p430
      %p433 = scmp.ne.s32.totalorder %s418, %s432
      %p434 = scmp.eq.s32.totalorder %s39, 0
      %p435 = por %p433, %p434
      %s436 = sadd.s32 %s41, %s42
      %s437 = sadd.s32 %s55, %s51
      %s438 = ssub.s32 %s40, %s59
      %s439 = ssub.s32 %s436, %s437
      %s440 = sor.u32 %s438, %s439
      %p441 = scmp.eq.s32.totalorder %s440, 0
      %s443 = sadd.s32 %s442, 1
      %s444 = scalar_select %p441, %s442, %s443
      %p447 = pneg %p441
      %p448 = scmp.eq.s32.totalorder %s33, 1
      %p449 = por %p447, %p448
      %p450 = scmp.ne.s32.totalorder %s442, %s445
      %p451 = scmp.eq.s32.totalorder %s33, 0
      %p452 = por %p450, %p451
      %p453 = scmp.ne.s32.totalorder %s442, %s445
      %p454 = scmp.eq.s32.totalorder %s38, 1
      %p455 = por %p453, %p454
      %p456 = scmp.ne.s32.totalorder %s445, %s446
      %p457 = scmp.eq.s32.totalorder %s38, 0
      %p458 = por %p456, %p457
      %p459 = scmp.ne.s32.totalorder %s445, %s446
      %p460 = scmp.eq.s32.totalorder %s39, 1
      %p461 = por %p459, %p460
      %p463 = scmp.ne.s32.totalorder %s446, %s462
      %p464 = scmp.eq.s32.totalorder %s39, 0
      %p465 = por %p463, %p464
      %p466 = scmp.le.s32.totalorder 1, %s33
      %p467 = scmp.lt.s32.totalorder %s33, 3
      %p468 = pnand %p466, %p467
      %p469 = pneg %p468
      // Predicated region
      $region9: #{tpu_custom_call.1} parent=5 // pred_check
        _
      $region10: #{tpu_custom_call.1} parent=5 // pred_check_branch
        %471 = sbr.rel (%p468) target = $region12
      $region11: #{tpu_custom_call.1} parent=5 // pred_region
        %s472 = ssub.s32 %s33, 1
        // Predicated region
        $region13: #{tpu_custom_call.1} parent=11 // pred_check
          %p473 = pneg %p155
        $region14: #{tpu_custom_call.1} parent=11 // pred_check_branch
          %475 = sbr.rel (%p473) target = $region16
        $region15: #{tpu_custom_call.1} parent=11 // pred_region
          _
        $region16: #{tpu_custom_call.1} parent=11 // pred_fallthru
          _
        // Predicated region
        $region17: #{tpu_custom_call.1} parent=11 // pred_check
          %p476 = pneg %p176
        $region18: #{tpu_custom_call.1} parent=11 // pred_check_branch
          %478 = sbr.rel (%p476) target = $region20
        $region19: #{tpu_custom_call.1} parent=11 // pred_region
          _
        $region20: #{tpu_custom_call.1} parent=11 // pred_fallthru
          _
        // Predicated region
        $region21: #{tpu_custom_call.1} parent=11 // pred_check
          %p479 = pneg %p197
        $region22: #{tpu_custom_call.1} parent=11 // pred_check_branch
          %481 = sbr.rel (%p479) target = $region24
        $region23: #{tpu_custom_call.1} parent=11 // pred_region
          _
        $region24: #{tpu_custom_call.1} parent=11 // pred_fallthru
          _
        // Predicated region
        $region25: #{tpu_custom_call.1} parent=11 // pred_check
          %p482 = pneg %p218
        $region26: #{tpu_custom_call.1} parent=11 // pred_check_branch
          %484 = sbr.rel (%p482) target = $region28
        $region27: #{tpu_custom_call.1} parent=11 // pred_region
          _
        $region28: #{tpu_custom_call.1} parent=11 // pred_fallthru
          _
        // Predicated region
        $region29: #{tpu_custom_call.1} parent=11 // pred_check
          %p485 = pneg %p239
        $region30: #{tpu_custom_call.1} parent=11 // pred_check_branch
          %487 = sbr.rel (%p485) target = $region32
        $region31: #{tpu_custom_call.1} parent=11 // pred_region
          %489 = vsyncadd [#allocation9], 0
          %s490 = sshll.u32 %s7, 4
          %s491 = int_to_ptr.hbm [resolvable:$true] %s490
          %s492 = sshll.u32 [#allocation10], 4
          %s493 = int_to_ptr.vmem [resolvable:$true] %s492
          %498 = dma.hbm_to_vmem [thread:$0]  %s491, 256, %s493, [#allocation9], 64, 64, 4
        $region32: #{tpu_custom_call.1} parent=11 // pred_fallthru
          _
        // Predicated region
        $region33: #{tpu_custom_call.1} parent=11 // pred_check
          %p499 = pneg %p260
        $region34: #{tpu_custom_call.1} parent=11 // pred_check_branch
          %501 = sbr.rel (%p499) target = $region36
        $region35: #{tpu_custom_call.1} parent=11 // pred_region
          _
        $region36: #{tpu_custom_call.1} parent=11 // pred_fallthru
          _
        // Predicated region
        $region37: #{tpu_custom_call.1} parent=11 // pred_check
          %p502 = pneg %p281
        $region38: #{tpu_custom_call.1} parent=11 // pred_check_branch
          %504 = sbr.rel (%p502) target = $region40
        $region39: #{tpu_custom_call.1} parent=11 // pred_region
          %506 = vsyncadd [#allocation12], 0
          %s507 = sshll.u32 %s9, 4
          %s508 = int_to_ptr.hbm [resolvable:$true] %s507
          %s509 = sshll.u32 [#allocation11], 4
          %s510 = int_to_ptr.vmem [resolvable:$true] %s509
          %515 = dma.hbm_to_vmem [thread:$0]  %s508, 256, %s510, [#allocation12], 64, 64, 4
        $region40: #{tpu_custom_call.1} parent=11 // pred_fallthru
          _
        // Predicated region
        $region41: #{tpu_custom_call.1} parent=11 // pred_check
          %p516 = pneg %p302
        $region42: #{tpu_custom_call.1} parent=11 // pred_check_branch
          %518 = sbr.rel (%p516) target = $region44
        $region43: #{tpu_custom_call.1} parent=11 // pred_region
          _
        $region44: #{tpu_custom_call.1} parent=11 // pred_fallthru
          _
        // Predicated region
        $region45: #{tpu_custom_call.1} parent=11 // pred_check
          %p519 = pneg %p323
        $region46: #{tpu_custom_call.1} parent=11 // pred_check_branch
          %521 = sbr.rel (%p519) target = $region48
        $region47: #{tpu_custom_call.1} parent=11 // pred_region
          _
        $region48: #{tpu_custom_call.1} parent=11 // pred_fallthru
          _
        // Predicated region
        $region49: #{tpu_custom_call.1} parent=11 // pred_check
          %p522 = pneg %p344
        $region50: #{tpu_custom_call.1} parent=11 // pred_check_branch
          %524 = sbr.rel (%p522) target = $region52
        $region51: #{tpu_custom_call.1} parent=11 // pred_region
          _
        $region52: #{tpu_custom_call.1} parent=11 // pred_fallthru
          _
        // Predicated region
        $region53: #{tpu_custom_call.1} parent=11 // pred_check
          %p525 = pneg %p365
        $region54: #{tpu_custom_call.1} parent=11 // pred_check_branch
          %527 = sbr.rel (%p525) target = $region56
        $region55: #{tpu_custom_call.1} parent=11 // pred_region
          %529 = vsyncadd [#allocation12], 0
          %s530 = sshll.u32 %s13, 4
          %s531 = int_to_ptr.hbm [resolvable:$true] %s530
          %s532 = sshll.u32 [#allocation13], 4
          %s533 = int_to_ptr.vmem [resolvable:$true] %s532
          %538 = dma.hbm_to_vmem [thread:$0]  %s531, 256, %s533, [#allocation12], 64, 64, 4
        $region56: #{tpu_custom_call.1} parent=11 // pred_fallthru
          _
        // Predicated region
        $region57: #{tpu_custom_call.1} parent=11 // pred_check
          %p539 = pneg %p386
        $region58: #{tpu_custom_call.1} parent=11 // pred_check_branch
          %541 = sbr.rel (%p539) target = $region60
        $region59: #{tpu_custom_call.1} parent=11 // pred_region
          _
        $region60: #{tpu_custom_call.1} parent=11 // pred_fallthru
          _
        // Predicated region
        $region61: #{tpu_custom_call.1} parent=11 // pred_check
          %p542 = pneg %p407
        $region62: #{tpu_custom_call.1} parent=11 // pred_check_branch
          %544 = sbr.rel (%p542) target = $region64
        $region63: #{tpu_custom_call.1} parent=11 // pred_region
          _
        $region64: #{tpu_custom_call.1} parent=11 // pred_fallthru
          _
        // Predicated region
        $region65: #{tpu_custom_call.1} parent=11 // pred_check
          %p545 = pneg %p428
        $region66: #{tpu_custom_call.1} parent=11 // pred_check_branch
          %547 = sbr.rel (%p545) target = $region68
        $region67: #{tpu_custom_call.1} parent=11 // pred_region
          _
        $region68: #{tpu_custom_call.1} parent=11 // pred_fallthru
          _
      $region12: #{tpu_custom_call.1} parent=5 // pred_fallthru
        _
      %p548 = scmp.lt.s32.totalorder %s33, 2
      // Predicated region
      $region69: #{tpu_custom_call.1} parent=5 // pred_check
        %p549 = pneg %p548
      $region70: #{tpu_custom_call.1} parent=5 // pred_check_branch
        %551 = sbr.rel (%p549) target = $region72
      $region71: #{tpu_custom_call.1} parent=5 // pred_region
        // Predicated region
        $region73: #{tpu_custom_call.1} parent=71 // pred_check
          %p552 = pneg %p76
        $region74: #{tpu_custom_call.1} parent=71 // pred_check_branch
          %554 = sbr.rel (%p552) target = $region76
        $region75: #{tpu_custom_call.1} parent=71 // pred_region
          %s555 = sadd.s32 %s41, %s42
          %p556 = scmp.lt.s32.totalorder %s40, 1
          %s557 = scalar_select %p556, %s40, 1
          %p558 = scmp.lt.s32.totalorder %s555, 0
          %s559 = scalar_select %p558, %s555, 0
          %s560 = sadd.s32 %s559, %s557
          %s561 = smul.addr %s560, 8
          %s562 = scalar_lea.vmem %s0, %s561
          %s563 = sadd.s32 %s41, %s42
        $region76: #{tpu_custom_call.1} parent=71 // pred_fallthru
          _
        // Predicated region
        $region77: #{tpu_custom_call.1} parent=71 // pred_check
          %p564 = pneg %p102
        $region78: #{tpu_custom_call.1} parent=71 // pred_check_branch
          %566 = sbr.rel (%p564) target = $region80
        $region79: #{tpu_custom_call.1} parent=71 // pred_region
          %s567 = sand.u32 %s92, 1
          %s568 = scalar_lea.sflag [#allocation6], %s567
          %s569 = sand.u32 %s92, 1
          %s570 = smul.addr %s569, 4
          %s571 = scalar_lea.vmem [#allocation5], %s570
          %573 = vsyncadd %s568, 0
          %s574 = smul.addr %s40, 4
          %s575 = scalar_lea.hbm %s1, %s574
          %s577 = sshll.u32 %s575, 4
          %s578 = int_to_ptr.hbm [resolvable:$true] %s577
          %s579 = sshll.u32 %s571, 4
          %s580 = int_to_ptr.vmem [resolvable:$true] %s579
          %582 = dma.hbm_to_vmem [thread:$0]  %s578, 64, %s580, %s568
        $region80: #{tpu_custom_call.1} parent=71 // pred_fallthru
          _
        // Predicated region
        $region81: #{tpu_custom_call.1} parent=71 // pred_check
          %p583 = pneg %p128
        $region82: #{tpu_custom_call.1} parent=71 // pred_check_branch
          %585 = sbr.rel (%p583) target = $region84
        $region83: #{tpu_custom_call.1} parent=71 // pred_region
          %s586 = sand.u32 %s33, 1
          %s587 = scalar_lea.sflag [#allocation9], %s586
          %s588 = sand.u32 %s118, 1
          %s589 = scalar_lea.vmem [#allocation8], %s588
          %591 = vsyncadd %s587, 0
          %s592 = scalar_lea.hbm %s2, %s40
          %s594 = sshll.u32 %s592, 4
          %s595 = int_to_ptr.hbm [resolvable:$true] %s594
          %s596 = sshll.u32 %s589, 4
          %s597 = int_to_ptr.vmem [resolvable:$true] %s596
          %599 = dma.hbm_to_vmem [thread:$0]  %s595, 16, %s597, %s587
        $region84: #{tpu_custom_call.1} parent=71 // pred_fallthru
          _
      $region72: #{tpu_custom_call.1} parent=5 // pred_fallthru
        _
      %p600 = scmp.le.s32.totalorder 1, %s33
      %p601 = scmp.lt.s32.totalorder %s33, 3
      %p602 = pnand %p600, %p601
      %p603 = pneg %p602
      // Predicated region
      $region85: #{tpu_custom_call.1} parent=5 // pred_check
        _
      $region86: #{tpu_custom_call.1} parent=5 // pred_check_branch
        %605 = sbr.rel (%p602) target = $region88
      $region87: #{tpu_custom_call.1} parent=5 // pred_region
        %s606 = ssub.s32 %s33, 1
        %s607 = sand.u32 %s95, 1
        %s608 = scalar_lea.sflag [#allocation6], %s607
        %s609 = sand.u32 %s95, 1
        %s610 = smul.addr %s609, 4
        %s611 = scalar_lea.vmem [#allocation5], %s610
        // Predicated region
        $region89: #{tpu_custom_call.1} parent=87 // pred_check
          %p612 = pneg %p108
        $region90: #{tpu_custom_call.1} parent=87 // pred_check_branch
          %614 = sbr.rel (%p612) target = $region92
        $region91: #{tpu_custom_call.1} parent=87 // pred_region
          %616 = dma.done %s608, 64
        $region92: #{tpu_custom_call.1} parent=87 // pred_fallthru
          _
        %s617 = sand.u32 %s38, 1
        %s618 = scalar_lea.sflag [#allocation9], %s617
        %s619 = sand.u32 %s121, 1
        %s620 = scalar_lea.vmem [#allocation8], %s619
        // Predicated region
        $region93: #{tpu_custom_call.1} parent=87 // pred_check
          %p621 = pneg %p134
        $region94: #{tpu_custom_call.1} parent=87 // pred_check_branch
          %623 = sbr.rel (%p621) target = $region96
        $region95: #{tpu_custom_call.1} parent=87 // pred_region
          %625 = dma.done %s618, 16
        $region96: #{tpu_custom_call.1} parent=87 // pred_fallthru
          _
        // Predicated region
        $region97: #{tpu_custom_call.1} parent=87 // pred_check
          %p626 = pneg %p239
        $region98: #{tpu_custom_call.1} parent=87 // pred_check_branch
          %628 = sbr.rel (%p626) target = $region100
        $region99: #{tpu_custom_call.1} parent=87 // pred_region
          %630 = dma.done [#allocation9], 256
        $region100: #{tpu_custom_call.1} parent=87 // pred_fallthru
          _
        // Predicated region
        $region101: #{tpu_custom_call.1} parent=87 // pred_check
          %p631 = pneg %p281
        $region102: #{tpu_custom_call.1} parent=87 // pred_check_branch
          %633 = sbr.rel (%p631) target = $region104
        $region103: #{tpu_custom_call.1} parent=87 // pred_region
          %635 = dma.done [#allocation12], 256
        $region104: #{tpu_custom_call.1} parent=87 // pred_fallthru
          _
        // Predicated region
        $region105: #{tpu_custom_call.1} parent=87 // pred_check
          %p636 = pneg %p365
        $region106: #{tpu_custom_call.1} parent=87 // pred_check_branch
          %638 = sbr.rel (%p636) target = $region108
        $region107: #{tpu_custom_call.1} parent=87 // pred_region
          %640 = dma.done [#allocation12], 256
        $region108: #{tpu_custom_call.1} parent=87 // pred_fallthru
          _
        %s641 = sadd.s32 %s44, %s45
        %p642 = scmp.lt.s32.totalorder %s43, 1
        %s643 = scalar_select %p642, %s43, 1
        %p644 = scmp.lt.s32.totalorder %s641, 0
        %s645 = scalar_select %p644, %s641, 0
        %s646 = sadd.s32 %s645, %s643
        %s647 = smul.addr %s646, 8
        %s648 = scalar_lea.vmem %s0, %s647
        %p649 = pneg %p82
        %p650 = pneg %p79
        %s651 = sand.u32 %s95, 1
        %s652 = scalar_lea.sflag [#allocation6], %s651
        %s653 = sand.u32 %s95, 1
        %s654 = smul.addr %s653, 4
        %s655 = scalar_lea.vmem [#allocation5], %s654
        %p656 = pneg %p108
        %p657 = pneg %p105
        %s658 = sand.u32 %s38, 1
        %s659 = scalar_lea.sflag [#allocation9], %s658
        %s660 = sand.u32 %s121, 1
        %s661 = scalar_lea.vmem [#allocation8], %s660
        %p662 = pneg %p134
        %p663 = pneg %p131
        %p664 = pneg %p155
        %p665 = pneg %p152
        %p666 = pneg %p176
        %p667 = pneg %p173
        %p668 = pneg %p197
        %p669 = pneg %p194
        %p670 = pneg %p218
        %p671 = pneg %p215
        %p672 = pneg %p239
        %p673 = pneg %p236
        %p674 = pneg %p260
        %p675 = pneg %p257
        %p676 = pneg %p281
        %p677 = pneg %p278
        %p678 = pneg %p302
        %p679 = pneg %p299
        %p680 = pneg %p323
        %p681 = pneg %p320
        %p682 = pneg %p344
        %p683 = pneg %p341
        %p684 = pneg %p365
        %p685 = pneg %p362
        %p686 = pneg %p386
        %p687 = pneg %p383
        %p688 = pneg %p407
        %p689 = pneg %p404
        %p690 = pneg %p428
        %p691 = pneg %p425
        %p692 = pneg %p458
        %p693 = pneg %p455
        %s694 = sand.u32 %s445, 1
        %s695 = scalar_lea.sflag [#allocation7], %s694
        %s696 = sand.u32 %s445, 1
        %s697 = smul.addr %s696, 8
        %s698 = scalar_lea.vmem [#allocation14], %s697
        %s699 = sadd.s32 %s44, %s45
        %p700 = scmp.lt.s32.totalorder %s43, 1
        %s701 = scalar_select %p700, %s43, 1
        %p702 = scmp.lt.s32.totalorder %s699, 0
        %s703 = scalar_select %p702, %s699, 0
        %s704 = sadd.s32 %s703, %s701
        %s705 = smul.addr %s704, 8
        %s706 = scalar_lea.vmem %s0, %s705
        %s707 = sadd.s32 %s44, %s45
        %s708 = sadd.s32 %s44, %s45
        %v710 = vld [vmem:[%s706] sm:$0xff]
        %p711 = scmp.eq.s32.totalorder %s45, 0
        // Predicated region
        $region109: #{tpu_custom_call.1} parent=87 // pred_check
          %p712 = pneg %p711
        $region110: #{tpu_custom_call.1} parent=87 // pred_check_branch
          %714 = sbr.rel (%p712) target = $region112
        $region111: #{tpu_custom_call.1} parent=87 // pred_region
          %v715 = vld [vmem:[%s611] sm:$0xf]
          %v716 = vld [vmem:[%s5] sm:$0xf]
          %v717 = vld [vmem:[%s5 + $0x4] sm:$0xf]
          %v718 = vld [vmem:[%s5 + $0x8] sm:$0xf]
          %v719 = vld [vmem:[%s5 + $0xc] sm:$0xf]
          %v720 = vld [vmem:[%s6] sm:$0x1]
          %v722 = vperm.slane %v720, 0
          %v728 = vunpack.c.l.b16 %v716
          %v729 = vunpack.c.l.b16 %v717
          %v730 = vunpack.c.l.b16 %v718
          %v731 = vunpack.c.l.b16 %v719
          %v732 = vpack.c.b16 %v729, %v728
          %v733 = vpack.c.b16 %v731, %v730
          %vm736 = vcmask 261120
          %v738 = vsel %vm736, %v715, 0
          %740 = vmatpush.bf16.msra.mxu0 0
          %741 = vmatpush.bf16.msra.mxu0 0
          %742 = vmatpush.bf16.msra.mxu0 0
          %743 = vmatpush.bf16.msra.mxu0 0
          %744 = vmatpush.bf16.msra.mxu0 0
          %745 = vmatpush.bf16.msra.mxu0 0
          %746 = vmatpush.bf16.msra.mxu0 %v733
          %747 = vmatpush.bf16.msra.mxu0 %v732
          %748 = vmatmul.bf16.gmra.mxu0 %v738
          %v749 = vpop.f32.mrf.mxu0
          %v750 = vadd.f32 %v722, %v749
          %v751 = vpop.f32.mrf.mxu0
          %752 = vdwg.mxu0
          %v753 = vld [vmem:[#allocation10] sm:$0xf]
          %v754 = vld [vmem:[#allocation10 + $0x4] sm:$0xf]
          %v755 = vld [vmem:[#allocation10 + $0x8] sm:$0xf]
          %v756 = vld [vmem:[#allocation10 + $0xc] sm:$0xf]
          %v757 = vld [vmem:[%s8] sm:$0x1]
          %v759 = vperm.slane %v757, 0
          %v765 = vunpack.c.l.b16 %v753
          %v766 = vunpack.c.l.b16 %v754
          %v767 = vunpack.c.l.b16 %v755
          %v768 = vunpack.c.l.b16 %v756
          %v769 = vpack.c.b16 %v766, %v765
          %v770 = vpack.c.b16 %v768, %v767
          %773 = vmatpush.bf16.msra.mxu0 0
          %774 = vmatpush.bf16.msra.mxu0 0
          %775 = vmatpush.bf16.msra.mxu0 0
          %776 = vmatpush.bf16.msra.mxu0 0
          %777 = vmatpush.bf16.msra.mxu0 0
          %778 = vmatpush.bf16.msra.mxu0 0
          %779 = vmatpush.bf16.msra.mxu0 %v770
          %780 = vmatpush.bf16.msra.mxu0 %v769
          %781 = vmatmul.bf16.gmra.mxu0 %v738
          %v782 = vpop.f32.mrf.mxu0
          %v783 = vadd.f32 %v759, %v782
          %v784 = vpop.f32.mrf.mxu0
          %785 = vdwg.mxu0
          %v786 = vpack.c.bf16 %v750, %v750
          %v787 = vpack.c.bf16 %v783, %v783
          %vm788 = vcmask 60416
          %789 = vst.msk [vmem:[#allocation2] sm:$0xf] %vm788, %v786
          %790 = vst.msk [vmem:[#allocation3] sm:$0xf] %vm788, %v787
          %792 = vrot.lane.b32.xlu0 %v786, 120
          %v793 = vpop.permute.xlu0 %792
          %s795 = scalar_lea.vmem [#allocation2], 4
          %796 = vst.msk [vmem:[%s795] sm:$0xf] %vm788, %v793
          %798 = vrot.lane.b32.xlu0 %v787, 120
          %v799 = vpop.permute.xlu0 %798
          %s801 = scalar_lea.vmem [#allocation3], 4
          %802 = vst.msk [vmem:[%s801] sm:$0xf] %vm788, %v799
          %803 = vrot.lane.b32.xlu0 %v786, 112
          %v804 = vpop.permute.xlu0 %803
          %s806 = scalar_lea.vmem [#allocation2], 8
          %807 = vst.msk [vmem:[%s806] sm:$0xf] %vm788, %v804
          %808 = vrot.lane.b32.xlu0 %v787, 112
          %v809 = vpop.permute.xlu0 %808
          %s811 = scalar_lea.vmem [#allocation3], 8
          %812 = vst.msk [vmem:[%s811] sm:$0xf] %vm788, %v809
          %813 = vrot.lane.b32.xlu0 %v786, 104
          %v814 = vpop.permute.xlu0 %813
          %s816 = scalar_lea.vmem [#allocation2], 12
          %817 = vst.msk [vmem:[%s816] sm:$0xf] %vm788, %v814
          %818 = vrot.lane.b32.xlu0 %v787, 104
          %v819 = vpop.permute.xlu0 %818
          %s821 = scalar_lea.vmem [#allocation3], 12
          %822 = vst.msk [vmem:[%s821] sm:$0xf] %vm788, %v819
        $region112: #{tpu_custom_call.1} parent=87 // pred_fallthru
          _
        %v823 = vpack.c.bf16 %v710, %v710
        %v824 = vld [vmem:[%s3] sm:$0xf]
        %v825 = vld [vmem:[%s3 + $0x4] sm:$0xf]
        %v826 = vld [vmem:[%s3 + $0x8] sm:$0xf]
        %v827 = vld [vmem:[%s3 + $0xc] sm:$0xf]
        %v828 = vld [vmem:[%s4] sm:$0x1]
        %v830 = vperm.slane %v828, 0
        %v836 = vunpack.c.l.b16 %v824
        %v837 = vunpack.c.l.b16 %v825
        %v838 = vunpack.c.l.b16 %v826
        %v839 = vunpack.c.l.b16 %v827
        %v840 = vpack.c.b16 %v837, %v836
        %v841 = vpack.c.b16 %v839, %v838
        %vm844 = vcmask 261120
        %v846 = vsel %vm844, %v823, 0
        %848 = vmatpush.bf16.msra.mxu0 0
        %849 = vmatpush.bf16.msra.mxu0 0
        %850 = vmatpush.bf16.msra.mxu0 0
        %851 = vmatpush.bf16.msra.mxu0 0
        %852 = vmatpush.bf16.msra.mxu0 0
        %853 = vmatpush.bf16.msra.mxu0 0
        %854 = vmatpush.bf16.msra.mxu0 %v841
        %855 = vmatpush.bf16.msra.mxu0 %v840
        %856 = vmatmul.bf16.gmra.mxu0 %v846
        %v857 = vpop.f32.mrf.mxu0
        %v858 = vadd.f32 %v830, %v857
        %v859 = vpop.f32.mrf.mxu0
        %860 = vdwg.mxu0
        %v861 = vmul.f32 %v858, 0.35355338
        %v862 = vpack.c.bf16 %v861, %v861
        %v863 = vld [vmem:[%s620] sm:$0x1]
        %v864 = vld [vmem:[#allocation2] sm:$0xf]
        %v866 = vperm.slane %v863, 0
        %vm868 = vcmask 64512
        %v870 = vsel %vm868, %v862, 0
        %v873 = vsel %vm868, %v864, 0
        %875 = vmatpush.bf16.xpose.msra.mxu0 0
        %876 = vmatpush.bf16.xpose.msra.mxu0 0
        %877 = vmatpush.bf16.xpose.msra.mxu0 0
        %878 = vmatpush.bf16.xpose.msra.mxu0 0
        %879 = vmatpush.bf16.xpose.msra.mxu0 0
        %880 = vmatpush.bf16.xpose.msra.mxu0 0
        %881 = vmatpush.bf16.xpose.msra.mxu0 0
        %882 = vmatpush.bf16.xpose.msra.mxu0 %v873
        %883 = vmatmul.bf16.gmra.mxu0 %v870
        %v884 = vpop.f32.mrf.mxu0
        %v885 = vadd.f32 %v866, %v884
        %v886 = vpop.f32.mrf.mxu0
        %887 = vdwg.mxu0
        %v888 = vsel %vm868, %v885, -inf
        %889 = vmax.xlane.f32.xlu0 %v888
        %v890 = vpop.xlane.xlu0 %889
        %v891 = vsub.f32 %v885, %v890
        %v892 = vmul.f32 %v891, 1.442695
        %v893 = vpow.pop %v892
        %v894 = vsel %vm868, %v893, 0.0
        %895 = vadd.xlane.f32.xlu0 %v894
        %v896 = vpop.xlane.xlu0 %895
        %v897 = vrcp.pop %v896
        %v898 = vmul.f32 %v893, %v897
        %v899 = vpack.c.bf16 %v898, %v898
        %v900 = vld [vmem:[#allocation3] sm:$0xf]
        %v902 = vsel %vm868, %v899, 0
        %vm904 = vcmask 1043456
        %v906 = vsel %vm904, %v900, 0
        %908 = vmatpush.bf16.msra.mxu0 0
        %909 = vmatpush.bf16.msra.mxu0 0
        %910 = vmatpush.bf16.msra.mxu0 0
        %911 = vmatpush.bf16.msra.mxu0 0
        %912 = vmatpush.bf16.msra.mxu0 0
        %913 = vmatpush.bf16.msra.mxu0 0
        %914 = vmatpush.bf16.msra.mxu0 0
        %915 = vmatpush.bf16.msra.mxu0 %v906
        %916 = vmatmul.bf16.gmra.mxu0 %v902
        %v917 = vpop.f32.mrf.mxu0
        %v918 = vadd.f32 0.0, %v917
        %v919 = vpop.f32.mrf.mxu0
        %920 = vdwg.mxu0
        %v921 = vpack.c.bf16 %v918, %v918
        %vm922 = vcmask 60416
        %923 = vst.msk [vmem:[#allocation4] sm:$0xf] %vm922, %v921
        %s924 = scalar_lea.vmem [#allocation2], 4
        %v925 = vld [vmem:[%s924] sm:$0xf]
        %v927 = vunpack.c.l.b16 %v862
        %v928 = vpack.c.b16 %v927, %v927
        %929 = vrot.lane.b32.xlu0 %v928, 120
        %v930 = vpop.permute.xlu0 %929
        %v932 = vsel %vm868, %v930, 0
        %v935 = vsel %vm868, %v925, 0
        %937 = vmatpush.bf16.xpose.msra.mxu0 0
        %938 = vmatpush.bf16.xpose.msra.mxu0 0
        %939 = vmatpush.bf16.xpose.msra.mxu0 0
        %940 = vmatpush.bf16.xpose.msra.mxu0 0
        %941 = vmatpush.bf16.xpose.msra.mxu0 0
        %942 = vmatpush.bf16.xpose.msra.mxu0 0
        %943 = vmatpush.bf16.xpose.msra.mxu0 0
        %944 = vmatpush.bf16.xpose.msra.mxu0 %v935
        %945 = vmatmul.bf16.gmra.mxu0 %v932
        %v946 = vpop.f32.mrf.mxu0
        %v947 = vadd.f32 %v866, %v946
        %v948 = vpop.f32.mrf.mxu0
        %949 = vdwg.mxu0
        %v950 = vsel %vm868, %v947, -inf
        %951 = vmax.xlane.f32.xlu0 %v950
        %v952 = vpop.xlane.xlu0 %951
        %v953 = vsub.f32 %v947, %v952
        %v954 = vmul.f32 %v953, 1.442695
        %v955 = vpow.pop %v954
        %v956 = vsel %vm868, %v955, 0.0
        %957 = vadd.xlane.f32.xlu0 %v956
        %v958 = vpop.xlane.xlu0 %957
        %v959 = vrcp.pop %v958
        %v960 = vmul.f32 %v955, %v959
        %v961 = vpack.c.bf16 %v960, %v960
        %s962 = scalar_lea.vmem [#allocation3], 4
        %v963 = vld [vmem:[%s962] sm:$0xf]
        %v965 = vsel %vm868, %v961, 0
        %v968 = vsel %vm904, %v963, 0
        %970 = vmatpush.bf16.msra.mxu0 0
        %971 = vmatpush.bf16.msra.mxu0 0
        %972 = vmatpush.bf16.msra.mxu0 0
        %973 = vmatpush.bf16.msra.mxu0 0
        %974 = vmatpush.bf16.msra.mxu0 0
        %975 = vmatpush.bf16.msra.mxu0 0
        %976 = vmatpush.bf16.msra.mxu0 0
        %977 = vmatpush.bf16.msra.mxu0 %v968
        %978 = vmatmul.bf16.gmra.mxu0 %v965
        %v979 = vpop.f32.mrf.mxu0
        %v980 = vadd.f32 0.0, %v979
        %v981 = vpop.f32.mrf.mxu0
        %982 = vdwg.mxu0
        %v983 = vpack.c.bf16 %v980, %v980
        %985 = vrot.lane.b32.xlu0 %v983, 8
        %v986 = vpop.permute.xlu0 %985
        %vm988 = vcmask 126016
        %989 = vst.msk [vmem:[#allocation4] sm:$0xf] %vm988, %v986
        %s990 = scalar_lea.vmem [#allocation2], 8
        %v991 = vld [vmem:[%s990] sm:$0xf]
        %992 = vrot.lane.b32.xlu0 %v928, 112
        %v993 = vpop.permute.xlu0 %992
        %v995 = vsel %vm868, %v993, 0
        %v998 = vsel %vm868, %v991, 0
        %1000 = vmatpush.bf16.xpose.msra.mxu0 0
        %1001 = vmatpush.bf16.xpose.msra.mxu0 0
        %1002 = vmatpush.bf16.xpose.msra.mxu0 0
        %1003 = vmatpush.bf16.xpose.msra.mxu0 0
        %1004 = vmatpush.bf16.xpose.msra.mxu0 0
        %1005 = vmatpush.bf16.xpose.msra.mxu0 0
        %1006 = vmatpush.bf16.xpose.msra.mxu0 0
        %1007 = vmatpush.bf16.xpose.msra.mxu0 %v998
        %1008 = vmatmul.bf16.gmra.mxu0 %v995
        %v1009 = vpop.f32.mrf.mxu0
        %v1010 = vadd.f32 %v866, %v1009
        %v1011 = vpop.f32.mrf.mxu0
        %1012 = vdwg.mxu0
        %v1013 = vsel %vm868, %v1010, -inf
        %1014 = vmax.xlane.f32.xlu0 %v1013
        %v1015 = vpop.xlane.xlu0 %1014
        %v1016 = vsub.f32 %v1010, %v1015
        %v1017 = vmul.f32 %v1016, 1.442695
        %v1018 = vpow.pop %v1017
        %v1019 = vsel %vm868, %v1018, 0.0
        %1020 = vadd.xlane.f32.xlu0 %v1019
        %v1021 = vpop.xlane.xlu0 %1020
        %v1022 = vrcp.pop %v1021
        %v1023 = vmul.f32 %v1018, %v1022
        %v1024 = vpack.c.bf16 %v1023, %v1023
        %s1025 = scalar_lea.vmem [#allocation3], 8
        %v1026 = vld [vmem:[%s1025] sm:$0xf]
        %v1028 = vsel %vm868, %v1024, 0
        %v1031 = vsel %vm904, %v1026, 0
        %1033 = vmatpush.bf16.msra.mxu0 0
        %1034 = vmatpush.bf16.msra.mxu0 0
        %1035 = vmatpush.bf16.msra.mxu0 0
        %1036 = vmatpush.bf16.msra.mxu0 0
        %1037 = vmatpush.bf16.msra.mxu0 0
        %1038 = vmatpush.bf16.msra.mxu0 0
        %1039 = vmatpush.bf16.msra.mxu0 0
        %1040 = vmatpush.bf16.msra.mxu0 %v1031
        %1041 = vmatmul.bf16.gmra.mxu0 %v1028
        %v1042 = vpop.f32.mrf.mxu0
        %v1043 = vadd.f32 0.0, %v1042
        %v1044 = vpop.f32.mrf.mxu0
        %1045 = vdwg.mxu0
        %v1046 = vpack.c.bf16 %v1043, %v1043
        %1048 = vrot.lane.b32.xlu0 %v1046, 16
        %v1049 = vpop.permute.xlu0 %1048
        %vm1051 = vcmask 191616
        %1052 = vst.msk [vmem:[#allocation4] sm:$0xf] %vm1051, %v1049
        %s1053 = scalar_lea.vmem [#allocation2], 12
        %v1054 = vld [vmem:[%s1053] sm:$0xf]
        %1055 = vrot.lane.b32.xlu0 %v928, 104
        %v1056 = vpop.permute.xlu0 %1055
        %v1058 = vsel %vm868, %v1056, 0
        %v1061 = vsel %vm868, %v1054, 0
        %1063 = vmatpush.bf16.xpose.msra.mxu0 0
        %1064 = vmatpush.bf16.xpose.msra.mxu0 0
        %1065 = vmatpush.bf16.xpose.msra.mxu0 0
        %1066 = vmatpush.bf16.xpose.msra.mxu0 0
        %1067 = vmatpush.bf16.xpose.msra.mxu0 0
        %1068 = vmatpush.bf16.xpose.msra.mxu0 0
        %1069 = vmatpush.bf16.xpose.msra.mxu0 0
        %1070 = vmatpush.bf16.xpose.msra.mxu0 %v1061
        %1071 = vmatmul.bf16.gmra.mxu0 %v1058
        %v1072 = vpop.f32.mrf.mxu0
        %v1073 = vadd.f32 %v866, %v1072
        %v1074 = vpop.f32.mrf.mxu0
        %1075 = vdwg.mxu0
        %v1076 = vsel %vm868, %v1073, -inf
        %1077 = vmax.xlane.f32.xlu0 %v1076
        %v1078 = vpop.xlane.xlu0 %1077
        %v1079 = vsub.f32 %v1073, %v1078
        %v1080 = vmul.f32 %v1079, 1.442695
        %v1081 = vpow.pop %v1080
        %v1082 = vsel %vm868, %v1081, 0.0
        %1083 = vadd.xlane.f32.xlu0 %v1082
        %v1084 = vpop.xlane.xlu0 %1083
        %v1085 = vrcp.pop %v1084
        %v1086 = vmul.f32 %v1081, %v1085
        %v1087 = vpack.c.bf16 %v1086, %v1086
        %s1088 = scalar_lea.vmem [#allocation3], 12
        %v1089 = vld [vmem:[%s1088] sm:$0xf]
        %v1091 = vsel %vm868, %v1087, 0
        %v1094 = vsel %vm904, %v1089, 0
        %1096 = vmatpush.bf16.msra.mxu0 0
        %1097 = vmatpush.bf16.msra.mxu0 0
        %1098 = vmatpush.bf16.msra.mxu0 0
        %1099 = vmatpush.bf16.msra.mxu0 0
        %1100 = vmatpush.bf16.msra.mxu0 0
        %1101 = vmatpush.bf16.msra.mxu0 0
        %1102 = vmatpush.bf16.msra.mxu0 0
        %1103 = vmatpush.bf16.msra.mxu0 %v1094
        %1104 = vmatmul.bf16.gmra.mxu0 %v1091
        %v1105 = vpop.f32.mrf.mxu0
        %v1106 = vadd.f32 0.0, %v1105
        %v1107 = vpop.f32.mrf.mxu0
        %1108 = vdwg.mxu0
        %v1109 = vpack.c.bf16 %v1106, %v1106
        %1111 = vrot.lane.b32.xlu0 %v1109, 24
        %v1112 = vpop.permute.xlu0 %1111
        %vm1114 = vcmask 257216
        %1115 = vst.msk [vmem:[#allocation4] sm:$0xf] %vm1114, %v1112
        %v1116 = vld [vmem:[#allocation4] sm:$0xf]
        %v1117 = vld [vmem:[#allocation11] sm:$0xf]
        %v1118 = vld [vmem:[#allocation11 + $0x4] sm:$0xf]
        %v1119 = vld [vmem:[#allocation11 + $0x8] sm:$0xf]
        %v1120 = vld [vmem:[#allocation11 + $0xc] sm:$0xf]
        %v1121 = vld [vmem:[%s10] sm:$0x1]
        %v1123 = vperm.slane %v1121, 0
        %v1129 = vunpack.c.l.b16 %v1117
        %v1130 = vunpack.c.l.b16 %v1118
        %v1131 = vunpack.c.l.b16 %v1119
        %v1132 = vunpack.c.l.b16 %v1120
        %v1133 = vpack.c.b16 %v1130, %v1129
        %v1134 = vpack.c.b16 %v1132, %v1131
        %v1138 = vsel %vm844, %v1116, 0
        %1140 = vmatpush.bf16.msra.mxu0 0
        %1141 = vmatpush.bf16.msra.mxu0 0
        %1142 = vmatpush.bf16.msra.mxu0 0
        %1143 = vmatpush.bf16.msra.mxu0 0
        %1144 = vmatpush.bf16.msra.mxu0 0
        %1145 = vmatpush.bf16.msra.mxu0 0
        %1146 = vmatpush.bf16.msra.mxu0 %v1134
        %1147 = vmatpush.bf16.msra.mxu0 %v1133
        %1148 = vmatmul.bf16.gmra.mxu0 %v1138
        %v1149 = vpop.f32.mrf.mxu0
        %v1150 = vadd.f32 %v1123, %v1149
        %v1151 = vpop.f32.mrf.mxu0
        %1152 = vdwg.mxu0
        %v1153 = vadd.f32 %v710, %v1150
        %v1154 = vsel %vm844, %v1153, 0.0
        %1155 = vadd.xlane.f32.xlu0 %v1154
        %v1156 = vpop.xlane.xlu0 %1155
        %v1157 = vrcp.pop 32.0
        %v1158 = vmul.f32 32.0, %v1157
        %v1159 = vsub.f32 1.0, %v1158
        %v1160 = vmul.f32 %v1157, %v1159
        %v1161 = vadd.f32 %v1157, %v1160
        %vm1162 = vweird.f32 %v1157
        %v1163 = vsel %vm1162, %v1157, %v1161
        %v1164 = vmul.f32 %v1156, %v1163
        %v1165 = vsub.f32 %v1153, %v1164
        %v1166 = vmul.f32 %v1165, %v1165
        %v1167 = vsel %vm844, %v1166, 0.0
        %1168 = vadd.xlane.f32.xlu0 %v1167
        %v1169 = vpop.xlane.xlu0 %1168
        %v1170 = vrcp.pop 31.0
        %v1171 = vmul.f32 31.0, %v1170
        %v1172 = vsub.f32 1.0, %v1171
        %v1173 = vmul.f32 %v1170, %v1172
        %v1174 = vadd.f32 %v1170, %v1173
        %vm1175 = vweird.f32 %v1170
        %v1176 = vsel %vm1175, %v1170, %v1174
        %v1177 = vmul.f32 %v1169, %v1176
        %v1178 = vrsqrt.pop %v1177
        %v1179 = vmul.f32 %v1178, %v1177
        %v1180 = vmul.f32 %v1179, %v1178
        %v1181 = vmul.f32 0.5, %v1180
        %v1182 = vsub.f32 1.5, %v1181
        %v1183 = vmul.f32 %v1178, %v1182
        %v1184 = vmul.f32 %v1177, %v1183
        %vm1185 = vcmp.eq.f32.partialorder %v1177, inf
        %v1186 = vsel %vm1185, %v1177, %v1184
        %vm1187 = vcmp.eq.f32.partialorder %v1177, 0.0
        %v1188 = vand.u32 %v1177, 2147483648
        %v1189 = vsel %vm1187, %v1188, %v1186
        %v1190 = vadd.f32 %v1189, 1e-06
        %v1191 = vrcp.pop %v1190
        %v1192 = vld [vmem:[%s11] sm:$0x1]
        %v1194 = vperm.slane %v1192, 0
        %v1196 = vmul.f32 %v1194, %v1165
        %v1197 = vmul.f32 %v1196, %v1191
        %v1198 = vld [vmem:[%s12] sm:$0x1]
        %v1200 = vperm.slane %v1198, 0
        %v1202 = vadd.f32 %v1197, %v1200
        %v1203 = vpack.c.bf16 %v1202, %v1202
        %v1204 = vld [vmem:[#allocation13] sm:$0xf]
        %v1205 = vld [vmem:[#allocation13 + $0x4] sm:$0xf]
        %v1206 = vld [vmem:[#allocation13 + $0x8] sm:$0xf]
        %v1207 = vld [vmem:[#allocation13 + $0xc] sm:$0xf]
        %v1208 = vld [vmem:[%s14] sm:$0x1]
        %v1210 = vperm.slane %v1208, 0
        %v1216 = vunpack.c.l.b16 %v1204
        %v1217 = vunpack.c.l.b16 %v1205
        %v1218 = vunpack.c.l.b16 %v1206
        %v1219 = vunpack.c.l.b16 %v1207
        %v1220 = vpack.c.b16 %v1217, %v1216
        %v1221 = vpack.c.b16 %v1219, %v1218
        %v1225 = vsel %vm844, %v1203, 0
        %1227 = vmatpush.bf16.msra.mxu0 0
        %1228 = vmatpush.bf16.msra.mxu0 0
        %1229 = vmatpush.bf16.msra.mxu0 0
        %1230 = vmatpush.bf16.msra.mxu0 0
        %1231 = vmatpush.bf16.msra.mxu0 0
        %1232 = vmatpush.bf16.msra.mxu0 0
        %1233 = vmatpush.bf16.msra.mxu0 %v1221
        %1234 = vmatpush.bf16.msra.mxu0 %v1220
        %1235 = vmatmul.bf16.gmra.mxu0 %v1225
        %v1236 = vpop.f32.mrf.mxu0
        %v1237 = vadd.f32 %v1210, %v1236
        %v1238 = vpop.f32.mrf.mxu0
        %1239 = vdwg.mxu0
        %v1240 = vmax.f32 %v1237, 0.0
        %v1241 = vpack.c.bf16 %v1240, %v1240
        %v1242 = vld [vmem:[%s15] sm:$0xf]
        %v1243 = vld [vmem:[%s15 + $0x4] sm:$0xf]
        %v1244 = vld [vmem:[%s15 + $0x8] sm:$0xf]
        %v1245 = vld [vmem:[%s15 + $0xc] sm:$0xf]
        %v1246 = vld [vmem:[%s15 + $0x10] sm:$0xf]
        %v1247 = vld [vmem:[%s15 + $0x14] sm:$0xf]
        %v1248 = vld [vmem:[%s15 + $0x18] sm:$0xf]
        %v1249 = vld [vmem:[%s15 + $0x1c] sm:$0xf]
        %v1250 = vld [vmem:[%s16] sm:$0x1]
        %v1252 = vperm.slane %v1250, 0
        %v1262 = vunpack.c.l.b16 %v1242
        %v1263 = vunpack.c.l.b16 %v1243
        %v1264 = vunpack.c.l.b16 %v1244
        %v1265 = vunpack.c.l.b16 %v1245
        %v1266 = vunpack.c.l.b16 %v1246
        %v1267 = vunpack.c.l.b16 %v1247
        %v1268 = vunpack.c.l.b16 %v1248
        %v1269 = vunpack.c.l.b16 %v1249
        %v1270 = vpack.c.b16 %v1263, %v1262
        %v1271 = vpack.c.b16 %v1265, %v1264
        %v1272 = vpack.c.b16 %v1267, %v1266
        %v1273 = vpack.c.b16 %v1269, %v1268
        %vm1278 = vcmask 523264
        %v1280 = vsel %vm1278, %v1241, 0
        %1282 = vmatpush.bf16.msra.mxu0 0
        %1283 = vmatpush.bf16.msra.mxu0 0
        %1284 = vmatpush.bf16.msra.mxu0 0
        %1285 = vmatpush.bf16.msra.mxu0 0
        %1286 = vmatpush.bf16.msra.mxu0 %v1273
        %1287 = vmatpush.bf16.msra.mxu0 %v1272
        %1288 = vmatpush.bf16.msra.mxu0 %v1271
        %1289 = vmatpush.bf16.msra.mxu0 %v1270
        %1290 = vmatmul.bf16.gmra.mxu0 %v1280
        %v1291 = vpop.f32.mrf.mxu0
        %v1292 = vadd.f32 %v1252, %v1291
        %v1293 = vpop.f32.mrf.mxu0
        %1294 = vdwg.mxu0
        %v1295 = vadd.f32 %v1153, %v1292
        %1296 = vst.msk [vmem:[%s698] sm:$0xff] %vm844, %v1295
        %s1297 = sand.u32 %s445, 1
        %s1298 = scalar_lea.sflag [#allocation7], %s1297
        %s1299 = sand.u32 %s445, 1
        %s1300 = smul.addr %s1299, 8
        %s1301 = scalar_lea.vmem [#allocation14], %s1300
        // Predicated region
        $region113: #{tpu_custom_call.1} parent=87 // pred_check
          %p1302 = pneg %p455
        $region114: #{tpu_custom_call.1} parent=87 // pred_check_branch
          %1304 = sbr.rel (%p1302) target = $region116
        $region115: #{tpu_custom_call.1} parent=87 // pred_region
          %s1305 = sadd.s32 %s44, %s45
          %1307 = vsyncadd %s1298, 0
          %s1308 = sadd.s32 %s1305, %s43
          %s1309 = smul.addr %s1308, 8
          %s1310 = scalar_lea.hbm %s17, %s1309
          %s1312 = sshll.u32 %s1301, 4
          %s1313 = int_to_ptr.vmem [resolvable:$true] %s1312
          %s1314 = sshll.u32 %s1310, 4
          %s1315 = int_to_ptr.hbm [resolvable:$true] %s1314
          %1317 = dma.vmem_to_hbm [thread:$0]  %s1313, 128, %s1315, %s1298
        $region116: #{tpu_custom_call.1} parent=87 // pred_fallthru
          _
      $region88: #{tpu_custom_call.1} parent=5 // pred_fallthru
        _
      %p1318 = scmp.le.s32.totalorder 2, %s33
      // Predicated region
      $region117: #{tpu_custom_call.1} parent=5 // pred_check
        %p1319 = pneg %p1318
      $region118: #{tpu_custom_call.1} parent=5 // pred_check_branch
        %1321 = sbr.rel (%p1319) target = $region120
      $region119: #{tpu_custom_call.1} parent=5 // pred_region
        %s1322 = ssub.s32 %s33, 2
        // Predicated region
        $region121: #{tpu_custom_call.1} parent=119 // pred_check
          %p1323 = pneg %p461
        $region122: #{tpu_custom_call.1} parent=119 // pred_check_branch
          %1325 = sbr.rel (%p1323) target = $region124
        $region123: #{tpu_custom_call.1} parent=119 // pred_region
          %s1326 = sand.u32 %s446, 1
          %s1327 = scalar_lea.sflag [#allocation7], %s1326
          %s1328 = sand.u32 %s446, 1
          %s1329 = smul.addr %s1328, 8
          %s1330 = scalar_lea.vmem [#allocation14], %s1329
          %1332 = dma.done %s1327, 128
        $region124: #{tpu_custom_call.1} parent=119 // pred_fallthru
          _
      $region120: #{tpu_custom_call.1} parent=5 // pred_fallthru
        _
    $region6: #{tpu_custom_call.1} parent=1 // loop_footer
      %s37 = sadd.s32 1, %s33
    $region7: #{tpu_custom_call.1} parent=1 // loop_footer_branch
      %32 = sbr.rel target = $region3
    $region8: #{tpu_custom_call.1} parent=1 // loop_exit
      _
    %1333 = vsyncpa [#allocation6], 1
    %s1334 = scalar_lea.sflag [#allocation6], 1
    %1335 = vsyncpa %s1334, 1
    %1336 = vsyncpa [#allocation9], 1
    %s1337 = scalar_lea.sflag [#allocation9], 1
    %1338 = vsyncpa %s1337, 1
    %1339 = vsyncpa [#allocation12], 1
    %1340 = vsyncpa [#allocation7], 1
    %s1341 = scalar_lea.sflag [#allocation7], 1
    %1342 = vsyncpa %s1341, 1

</llo_original>
